<compile_context>
chip_gen: v7x
topology: tpu7x:2x2x1
jax: 0.10.0
libtpu: 0.0.40
codegen_flags: <defaults>
</compile_context>

<pallas_src>
import jax
import jax.numpy as jnp
from jax import lax
from jax.experimental import pallas as pl
from jax.experimental.pallas import tpu as pltpu

B_PAD = 8          # one sublane tile
GATE_LANES = 128   # one lane tile per LSTM gate
OUT_LANES = 128    # lane-dense output slab


def cnn_lstm_forward(x, params):
    """x: (B, input_dim, L) float32 — the layout PyTorch Conv1d expects."""
    w1, b1, w2, b2, w_ih, w_hh, b_ih, b_hh, w_fc, b_fc = params
    B, Cin, L = x.shape
    assert L % 4 == 0, "two MaxPool1d(2,2) stages require L % 4 == 0"
    H = w_hh.shape[1]
    C = w_fc.shape[0]
    assert B <= B_PAD and H <= GATE_LANES and C <= OUT_LANES
    L2, T = L // 2, L // 4
    Bp = B_PAD
    f32, bf16 = jnp.float32, jnp.bfloat16

    # ---------------- wrapper-side layout plumbing (plain XLA glue) ----------------
    # time-major, batch padded to one sublane tile: (L, Bp, Cin)
    xt = jnp.transpose(x, (2, 0, 1)).astype(f32)
    xt = jnp.pad(xt, ((0, 0), (0, Bp - B), (0, 0)))
    # one zero time-step per side (conv1 'same' padding), then tap-concatenate so conv1
    # is a single (L*Bp, 3*Cin) @ (3*Cin, 16) matmul inside the kernel.
    xp = jnp.pad(xt, ((1, 1), (0, 0), (0, 0)))                       # (L+2, Bp, Cin)
    xcat1 = jnp.concatenate([xp[0:L], xp[1:L + 1], xp[2:L + 2]], axis=-1)
    xcat1 = xcat1.reshape(L * Bp, 3 * Cin).astype(bf16)

    # fused-tap conv weights: W_stack[k*Cin + c, o] = w[o, c, k]  (matches concat order)
    w1s = jnp.transpose(w1, (2, 1, 0)).reshape(3 * Cin, 16).astype(bf16)
    w2s = jnp.transpose(w2, (2, 1, 0)).reshape(3 * 16, 32).astype(bf16)
    b1r = b1.reshape(1, 16).astype(f32)
    b2r = b2.reshape(1, 32).astype(f32)

    # LSTM weights gate-packed so each gate (i,f,g,o) owns its own 128-lane tile.
    def pack_gates(w_t):                                # (rows, 4H) -> (rows, 512)
        r = w_t.shape[0]
        wg = w_t.reshape(r, 4, H)
        wg = jnp.pad(wg, ((0, 0), (0, 0), (0, GATE_LANES - H)))
        return wg.reshape(r, 4 * GATE_LANES).astype(f32)

    wih_p = pack_gates(jnp.transpose(w_ih))                          # (32, 512)
    whh_p = pack_gates(jnp.transpose(w_hh))                          # (H, 512)
    whh_p = jnp.pad(whh_p, ((0, GATE_LANES - H), (0, 0)))            # (128, 512)
    bl_p = pack_gates((b_ih + b_hh).reshape(1, 4 * H))               # (1, 512)

    wfc_p = jnp.pad(jnp.transpose(w_fc).astype(f32),
                    ((0, GATE_LANES - H), (0, OUT_LANES - C)))       # (128, 128)
    bfc_p = jnp.pad(b_fc.reshape(1, C).astype(f32), ((0, 0), (0, OUT_LANES - C)))

    # ------------------------------- kernel ---------------------------------------
    def kernel(xc1_ref, w1_ref, b1_ref, w2_ref, b2_ref,
               wih_ref, whh_ref, bl_ref, wfc_ref, bfc_ref, out_ref):
        # conv1: one fused-tap bf16 matmul over the whole (time*batch) slab
        y1 = jnp.dot(xc1_ref[...], w1_ref[...], preferred_element_type=f32)
        y1 = jnp.maximum(y1 + b1_ref[...], 0.0)                      # (L*Bp, 16) f32

        # maxpool1: pure VPU max over even/odd time steps (tile-aligned reshape)
        y1 = y1.reshape(L2, 2, Bp, 16)
        p1 = jnp.maximum(y1[:, 0], y1[:, 1])                         # (L2, Bp, 16)

        # conv2: zero time-pad + tap concat on lanes -> one fused matmul (K = 48)
        zpad = jnp.zeros((1, Bp, 16), f32)
        p1p = jnp.concatenate([zpad, p1, zpad], axis=0)              # (L2+2, Bp, 16)
        xc2 = jnp.concatenate([p1p[0:L2], p1p[1:L2 + 1], p1p[2:L2 + 2]], axis=-1)
        xc2 = xc2.reshape(L2 * Bp, 3 * 16).astype(bf16)
        y2 = jnp.dot(xc2, w2_ref[...], preferred_element_type=f32)
        y2 = jnp.maximum(y2 + b2_ref[...], 0.0)                      # (L2*Bp, 32)

        # maxpool2
        y2 = y2.reshape(T, 2, Bp, 32)
        p2 = jnp.maximum(y2[:, 0], y2[:, 1]).reshape(T * Bp, 32)     # (T*Bp, 32)

        # LSTM input projection for all timesteps at once (f32, gate-lane-packed)
        proj = jnp.dot(p2, wih_ref[...], preferred_element_type=f32) + bl_ref[...]
        proj = proj.reshape(T, Bp, 4 * GATE_LANES)                   # (T, Bp, 512)
        whh = whh_ref[...]                                           # (128, 512)

        h = jnp.zeros((Bp, GATE_LANES), f32)
        c = jnp.zeros((Bp, GATE_LANES), f32)
        # T is tiny and static -> unrolled Python loop; each step's gate input is a
        # free leading-axis view and every gate slice sits on its own 128-lane tile.
        # TODO(synk): for long sequences switch to lax.fori_loop(..., unroll=True).
        for t in range(T):
            g = proj[t] + jnp.dot(h, whh, preferred_element_type=f32)
            i_g = jax.nn.sigmoid(g[:, 0:GATE_LANES])
            f_g = jax.nn.sigmoid(g[:, GATE_LANES:2 * GATE_LANES])
            g_g = jnp.tanh(g[:, 2 * GATE_LANES:3 * GATE_LANES])
            o_g = jax.nn.sigmoid(g[:, 3 * GATE_LANES:4 * GATE_LANES])
            c = f_g * c + i_g * g_g
            h = o_g * jnp.tanh(c)

        # lane-dense (8, 128) output slab; wrapper slices to (B, C)
        out_ref[...] = jnp.dot(h, wfc_ref[...], preferred_element_type=f32) + bfc_ref[...]

    operands = (xcat1, w1s, b1r, w2s, b2r, wih_p, whh_p, bl_p, wfc_p, bfc_p)

    def full(a):
        nd = a.ndim
        return pl.BlockSpec(a.shape, lambda i, _nd=nd: (0,) * _nd)

    out = pl.pallas_call(
        kernel,
        out_shape=jax.ShapeDtypeStruct((Bp, OUT_LANES), f32),
        grid=(1,),
        in_specs=[full(a) for a in operands],
        out_specs=pl.BlockSpec((Bp, OUT_LANES), lambda i: (0, 0)),
        compiler_params=pltpu.CompilerParams(
            dimension_semantics=("arbitrary",),
            vmem_limit_bytes=32 * 1024 * 1024),
    )(*operands)
    return out[:B, :C]


# ------------------------- pure-JAX reference (for checking) ----------------------
def reference_forward(x, params):
    w1, b1, w2, b2, w_ih, w_hh, b_ih, b_hh, w_fc, b_fc = params

    def conv1d_same(z, w, b):
        y = lax.conv_general_dilated(z, w, window_strides=(1,), padding=[(1, 1)],
                                     dimension_numbers=("NCH", "OIH", "NCH"))
        return y + b[None, :, None]

    y = jax.nn.relu(conv1d_same(x, w1, b1))
    y = lax.reduce_window(y, -jnp.inf, lax.max, (1, 1, 2), (1, 1, 2), "VALID")
    y = jax.nn.relu(conv1d_same(y, w2, b2))
    y = lax.reduce_window(y, -jnp.inf, lax.max, (1, 1, 2), (1, 1, 2), "VALID")
    seq = jnp.transpose(y, (2, 0, 1))                                # (T, B, 32)

    B, H = x.shape[0], w_hh.shape[1]

    def step(carry, xt):
        h, c = carry
        g = xt @ w_ih.T + h @ w_hh.T + b_ih + b_hh
        i, f, gg, o = jnp.split(g, 4, axis=-1)
        c = jax.nn.sigmoid(f) * c + jax.nn.sigmoid(i) * jnp.tanh(gg)
        h = jax.nn.sigmoid(o) * jnp.tanh(c)
        return (h, c), None

    (h, _), _ = lax.scan(step, (jnp.zeros((B, H)), jnp.zeros((B, H))), seq)
    return h @ w_fc.T + b_fc


def init_params(key, input_dim, hidden_dim, num_classes):
    ks = jax.random.split(key, 10)
    s = 0.1
    w1 = jax.random.normal(ks[0], (16, input_dim, 3), jnp.float32) * s        # Conv1d #1
    b1 = jax.random.normal(ks[1], (16,), jnp.float32) * s
    w2 = jax.random.normal(ks[2], (32, 16, 3), jnp.float32) * s               # Conv1d #2
    b2 = jax.random.normal(ks[3], (32,), jnp.float32) * s
    w_ih = jax.random.normal(ks[4], (4 * hidden_dim, 32), jnp.float32) * s    # LSTM (i,f,g,o)
    w_hh = jax.random.normal(ks[5], (4 * hidden_dim, hidden_dim), jnp.float32) * s
    b_ih = jax.random.normal(ks[6], (4 * hidden_dim,), jnp.float32) * s
    b_hh = jax.random.normal(ks[7], (4 * hidden_dim,), jnp.float32) * s
    w_fc = jax.random.normal(ks[8], (num_classes, hidden_dim), jnp.float32) * s
    b_fc = jax.random.normal(ks[9], (num_classes,), jnp.float32) * s
    return (w1, b1, w2, b2, w_ih, w_hh, b_ih, b_hh, w_fc, b_fc)


if __name__ == "__main__":
    B, input_dim, L = 2, 4, 16          # x: (batch, channels=input_dim, length)
    hidden_dim, num_classes = 64, 5     # hidden_dim = 64 per the reference module

    key = jax.random.PRNGKey(0)
    kx, kp = jax.random.split(key)
    x = jax.random.normal(kx, (B, input_dim, L), jnp.float32)
    params = init_params(kp, input_dim, hidden_dim, num_classes)

    out = jax.jit(cnn_lstm_forward)(x, params)
    out = jax.block_until_ready(out)
    assert out.shape == (B, num_classes)
    assert bool(jnp.all(jnp.isfinite(out)))

    ref = reference_forward(x, params)
    err = float(jnp.max(jnp.abs(out - ref)))
    # 2e-2 tolerance: conv matmul operands are bf16 (per perf review); reference is f32.
    assert err < 2e-2, f"kernel/reference mismatch: max abs err = {err}"

    print("KERNEL_OK")
</pallas_src>

<mosaic_0001>
module attributes {stable_mosaic.version = 11 : i64} {
  func.func @kernel(%arg0: i32, %arg1: memref<128x12xbf16, #tpu.memory_space<vmem>>, %arg2: memref<12x16xbf16, #tpu.memory_space<vmem>>, %arg3: memref<1x16xf32, #tpu.memory_space<vmem>>, %arg4: memref<48x32xbf16, #tpu.memory_space<vmem>>, %arg5: memref<1x32xf32, #tpu.memory_space<vmem>>, %arg6: memref<32x512xf32, #tpu.memory_space<vmem>>, %arg7: memref<128x512xf32, #tpu.memory_space<vmem>>, %arg8: memref<1x512xf32, #tpu.memory_space<vmem>>, %arg9: memref<128x128xf32, #tpu.memory_space<vmem>>, %arg10: memref<1x128xf32, #tpu.memory_space<vmem>>, %arg11: memref<8x128xf32, #tpu.memory_space<vmem>>) attributes {dimension_semantics = [#tpu.dimension_semantics<arbitrary>], iteration_bounds = array<i64: 1>, scalar_prefetch = 0 : i64, scratch_operands = 0 : i64, tpu.core_type = #tpu.core_type<tc>, window_params = [{pipeline_mode = #tpu.pipeline_mode<synchronous>, transform_indices = @transform_0, window_bounds = array<i64: 128, 12>}, {pipeline_mode = #tpu.pipeline_mode<synchronous>, transform_indices = @transform_1, window_bounds = array<i64: 12, 16>}, {pipeline_mode = #tpu.pipeline_mode<synchronous>, transform_indices = @transform_2, window_bounds = array<i64: 1, 16>}, {pipeline_mode = #tpu.pipeline_mode<synchronous>, transform_indices = @transform_3, window_bounds = array<i64: 48, 32>}, {pipeline_mode = #tpu.pipeline_mode<synchronous>, transform_indices = @transform_4, window_bounds = array<i64: 1, 32>}, {pipeline_mode = #tpu.pipeline_mode<synchronous>, transform_indices = @transform_5, window_bounds = array<i64: 32, 512>}, {pipeline_mode = #tpu.pipeline_mode<synchronous>, transform_indices = @transform_6, window_bounds = array<i64: 128, 512>}, {pipeline_mode = #tpu.pipeline_mode<synchronous>, transform_indices = @transform_7, window_bounds = array<i64: 1, 512>}, {pipeline_mode = #tpu.pipeline_mode<synchronous>, transform_indices = @transform_8, window_bounds = array<i64: 128, 128>}, {pipeline_mode = #tpu.pipeline_mode<synchronous>, transform_indices = @transform_9, window_bounds = array<i64: 1, 128>}, {pipeline_mode = #tpu.pipeline_mode<synchronous>, transform_indices = @transform_10, window_bounds = array<i64: 8, 128>}]} {
    %c0 = arith.constant 0 : index
    %c0_0 = arith.constant 0 : index
    %0 = vector.load %arg1[%c0, %c0_0] : memref<128x12xbf16, #tpu.memory_space<vmem>>, vector<128x12xbf16>
    %c0_1 = arith.constant 0 : index
    %c0_2 = arith.constant 0 : index
    %1 = vector.load %arg2[%c0_1, %c0_2] : memref<12x16xbf16, #tpu.memory_space<vmem>>, vector<12x16xbf16>
    %cst = arith.constant dense<0.000000e+00> : vector<128x16xf32>
    %2 = tpu.matmul %0, %1, %cst {dimension_numbers = #tpu.dot_dimension_numbers<[1], [0], [0], [1], [0, 0, 1, 1], [], []>} : vector<128x12xbf16>, vector<12x16xbf16>, vector<128x16xf32> -> vector<128x16xf32>
    %c0_3 = arith.constant 0 : index
    %c0_4 = arith.constant 0 : index
    %3 = vector.load %arg3[%c0_3, %c0_4] : memref<1x16xf32, #tpu.memory_space<vmem>>, vector<1x16xf32>
    %4 = vector.broadcast %3 : vector<1x16xf32> to vector<128x16xf32>
    %5 = arith.addf %2, %4 : vector<128x16xf32>
    %cst_5 = arith.constant 0.000000e+00 : f32
    %6 = vector.broadcast %cst_5 : f32 to vector<128x16xf32>
    %7 = arith.maximumf %5, %6 : vector<128x16xf32>
    %8 = vector.shape_cast %7 : vector<128x16xf32> to vector<8x2x8x16xf32>
    %9 = vector.extract_strided_slice %8 {offsets = [0, 0, 0, 0], sizes = [8, 1, 8, 16], strides = [1, 1, 1, 1]} : vector<8x2x8x16xf32> to vector<8x1x8x16xf32>
    %10 = vector.shape_cast %9 : vector<8x1x8x16xf32> to vector<8x8x16xf32>
    %11 = vector.extract_strided_slice %8 {offsets = [0, 1, 0, 0], sizes = [8, 1, 8, 16], strides = [1, 1, 1, 1]} : vector<8x2x8x16xf32> to vector<8x1x8x16xf32>
    %12 = vector.shape_cast %11 : vector<8x1x8x16xf32> to vector<8x8x16xf32>
    %13 = arith.maximumf %10, %12 : vector<8x8x16xf32>
    %cst_6 = arith.constant 0.000000e+00 : f32
    %14 = vector.broadcast %cst_6 : f32 to vector<1x8x16xf32>
    %15 = tpu.concatenate %14, %13, %14 in 0 : vector<1x8x16xf32>, vector<8x8x16xf32>, vector<1x8x16xf32> -> vector<10x8x16xf32>
    %16 = vector.extract_strided_slice %15 {offsets = [0, 0, 0], sizes = [8, 8, 16], strides = [1, 1, 1]} : vector<10x8x16xf32> to vector<8x8x16xf32>
    %17 = vector.extract_strided_slice %15 {offsets = [1, 0, 0], sizes = [8, 8, 16], strides = [1, 1, 1]} : vector<10x8x16xf32> to vector<8x8x16xf32>
    %18 = vector.extract_strided_slice %15 {offsets = [2, 0, 0], sizes = [8, 8, 16], strides = [1, 1, 1]} : vector<10x8x16xf32> to vector<8x8x16xf32>
    %19 = tpu.concatenate %16, %17, %18 in 2 : vector<8x8x16xf32>, vector<8x8x16xf32>, vector<8x8x16xf32> -> vector<8x8x48xf32>
    %20 = vector.shape_cast %19 : vector<8x8x48xf32> to vector<64x48xf32>
    %21 = arith.truncf %20 : vector<64x48xf32> to vector<64x48xbf16>
    %c0_7 = arith.constant 0 : index
    %c0_8 = arith.constant 0 : index
    %22 = vector.load %arg4[%c0_7, %c0_8] : memref<48x32xbf16, #tpu.memory_space<vmem>>, vector<48x32xbf16>
    %cst_9 = arith.constant dense<0.000000e+00> : vector<64x32xf32>
    %23 = tpu.matmul %21, %22, %cst_9 {dimension_numbers = #tpu.dot_dimension_numbers<[1], [0], [0], [1], [0, 0, 1, 1], [], []>} : vector<64x48xbf16>, vector<48x32xbf16>, vector<64x32xf32> -> vector<64x32xf32>
    %c0_10 = arith.constant 0 : index
    %c0_11 = arith.constant 0 : index
    %24 = vector.load %arg5[%c0_10, %c0_11] : memref<1x32xf32, #tpu.memory_space<vmem>>, vector<1x32xf32>
    %25 = vector.broadcast %24 : vector<1x32xf32> to vector<64x32xf32>
    %26 = arith.addf %23, %25 : vector<64x32xf32>
    %cst_12 = arith.constant 0.000000e+00 : f32
    %27 = vector.broadcast %cst_12 : f32 to vector<64x32xf32>
    %28 = arith.maximumf %26, %27 : vector<64x32xf32>
    %29 = vector.shape_cast %28 : vector<64x32xf32> to vector<4x2x8x32xf32>
    %30 = vector.extract_strided_slice %29 {offsets = [0, 0, 0, 0], sizes = [4, 1, 8, 32], strides = [1, 1, 1, 1]} : vector<4x2x8x32xf32> to vector<4x1x8x32xf32>
    %31 = vector.shape_cast %30 : vector<4x1x8x32xf32> to vector<4x8x32xf32>
    %32 = vector.extract_strided_slice %29 {offsets = [0, 1, 0, 0], sizes = [4, 1, 8, 32], strides = [1, 1, 1, 1]} : vector<4x2x8x32xf32> to vector<4x1x8x32xf32>
    %33 = vector.shape_cast %32 : vector<4x1x8x32xf32> to vector<4x8x32xf32>
    %34 = arith.maximumf %31, %33 : vector<4x8x32xf32>
    %35 = vector.shape_cast %34 : vector<4x8x32xf32> to vector<32x32xf32>
    %c0_13 = arith.constant 0 : index
    %c0_14 = arith.constant 0 : index
    %36 = vector.load %arg6[%c0_13, %c0_14] : memref<32x512xf32, #tpu.memory_space<vmem>>, vector<32x512xf32>
    %cst_15 = arith.constant dense<0.000000e+00> : vector<32x512xf32>
    %37 = tpu.matmul %35, %36, %cst_15 {dimension_numbers = #tpu.dot_dimension_numbers<[1], [0], [0], [1], [0, 0, 1, 1], [], []>} : vector<32x32xf32>, vector<32x512xf32>, vector<32x512xf32> -> vector<32x512xf32>
    %c0_16 = arith.constant 0 : index
    %c0_17 = arith.constant 0 : index
    %38 = vector.load %arg8[%c0_16, %c0_17] : memref<1x512xf32, #tpu.memory_space<vmem>>, vector<1x512xf32>
    %39 = vector.broadcast %38 : vector<1x512xf32> to vector<32x512xf32>
    %40 = arith.addf %37, %39 : vector<32x512xf32>
    %41 = vector.shape_cast %40 : vector<32x512xf32> to vector<4x8x512xf32>
    %c0_18 = arith.constant 0 : index
    %c0_19 = arith.constant 0 : index
    %42 = vector.load %arg7[%c0_18, %c0_19] : memref<128x512xf32, #tpu.memory_space<vmem>>, vector<128x512xf32>
    %cst_20 = arith.constant 0.000000e+00 : f32
    %43 = vector.broadcast %cst_20 : f32 to vector<8x128xf32>
    %cst_21 = arith.constant 0.000000e+00 : f32
    %44 = vector.broadcast %cst_21 : f32 to vector<8x128xf32>
    %45 = vector.extract_strided_slice %41 {offsets = [0, 0, 0], sizes = [1, 8, 512], strides = [1, 1, 1]} : vector<4x8x512xf32> to vector<1x8x512xf32>
    %46 = vector.shape_cast %45 : vector<1x8x512xf32> to vector<8x512xf32>
    %cst_22 = arith.constant dense<0.000000e+00> : vector<8x512xf32>
    %47 = tpu.matmul %43, %42, %cst_22 {dimension_numbers = #tpu.dot_dimension_numbers<[1], [0], [0], [1], [0, 0, 1, 1], [], []>} : vector<8x128xf32>, vector<128x512xf32>, vector<8x512xf32> -> vector<8x512xf32>
    %48 = arith.addf %46, %47 : vector<8x512xf32>
    %49 = vector.extract_strided_slice %48 {offsets = [0, 0], sizes = [8, 128], strides = [1, 1]} : vector<8x512xf32> to vector<8x128xf32>
    %50 = arith.negf %49 : vector<8x128xf32>
    %51 = math.exp %50 : vector<8x128xf32>
    %cst_23 = arith.constant 1.000000e+00 : f32
    %52 = vector.broadcast %cst_23 : f32 to vector<8x128xf32>
    %53 = arith.addf %52, %51 : vector<8x128xf32>
    %54 = arith.divf %52, %53 : vector<8x128xf32>
    %55 = vector.extract_strided_slice %48 {offsets = [0, 128], sizes = [8, 128], strides = [1, 1]} : vector<8x512xf32> to vector<8x128xf32>
    %56 = arith.negf %55 : vector<8x128xf32>
    %57 = math.exp %56 : vector<8x128xf32>
    %cst_24 = arith.constant 1.000000e+00 : f32
    %58 = vector.broadcast %cst_24 : f32 to vector<8x128xf32>
    %59 = arith.addf %58, %57 : vector<8x128xf32>
    %60 = arith.divf %58, %59 : vector<8x128xf32>
    %61 = vector.extract_strided_slice %48 {offsets = [0, 256], sizes = [8, 128], strides = [1, 1]} : vector<8x512xf32> to vector<8x128xf32>
    %62 = math.tanh %61 : vector<8x128xf32>
    %63 = vector.extract_strided_slice %48 {offsets = [0, 384], sizes = [8, 128], strides = [1, 1]} : vector<8x512xf32> to vector<8x128xf32>
    %64 = arith.negf %63 : vector<8x128xf32>
    %65 = math.exp %64 : vector<8x128xf32>
    %cst_25 = arith.constant 1.000000e+00 : f32
    %66 = vector.broadcast %cst_25 : f32 to vector<8x128xf32>
    %67 = arith.addf %66, %65 : vector<8x128xf32>
    %68 = arith.divf %66, %67 : vector<8x128xf32>
    %69 = arith.mulf %60, %44 : vector<8x128xf32>
    %70 = arith.mulf %54, %62 : vector<8x128xf32>
    %71 = arith.addf %69, %70 : vector<8x128xf32>
    %72 = math.tanh %71 : vector<8x128xf32>
    %73 = arith.mulf %68, %72 : vector<8x128xf32>
    %74 = vector.extract_strided_slice %41 {offsets = [1, 0, 0], sizes = [1, 8, 512], strides = [1, 1, 1]} : vector<4x8x512xf32> to vector<1x8x512xf32>
    %75 = vector.shape_cast %74 : vector<1x8x512xf32> to vector<8x512xf32>
    %cst_26 = arith.constant dense<0.000000e+00> : vector<8x512xf32>
    %76 = tpu.matmul %73, %42, %cst_26 {dimension_numbers = #tpu.dot_dimension_numbers<[1], [0], [0], [1], [0, 0, 1, 1], [], []>} : vector<8x128xf32>, vector<128x512xf32>, vector<8x512xf32> -> vector<8x512xf32>
    %77 = arith.addf %75, %76 : vector<8x512xf32>
    %78 = vector.extract_strided_slice %77 {offsets = [0, 0], sizes = [8, 128], strides = [1, 1]} : vector<8x512xf32> to vector<8x128xf32>
    %79 = arith.negf %78 : vector<8x128xf32>
    %80 = math.exp %79 : vector<8x128xf32>
    %cst_27 = arith.constant 1.000000e+00 : f32
    %81 = vector.broadcast %cst_27 : f32 to vector<8x128xf32>
    %82 = arith.addf %81, %80 : vector<8x128xf32>
    %83 = arith.divf %81, %82 : vector<8x128xf32>
    %84 = vector.extract_strided_slice %77 {offsets = [0, 128], sizes = [8, 128], strides = [1, 1]} : vector<8x512xf32> to vector<8x128xf32>
    %85 = arith.negf %84 : vector<8x128xf32>
    %86 = math.exp %85 : vector<8x128xf32>
    %cst_28 = arith.constant 1.000000e+00 : f32
    %87 = vector.broadcast %cst_28 : f32 to vector<8x128xf32>
    %88 = arith.addf %87, %86 : vector<8x128xf32>
    %89 = arith.divf %87, %88 : vector<8x128xf32>
    %90 = vector.extract_strided_slice %77 {offsets = [0, 256], sizes = [8, 128], strides = [1, 1]} : vector<8x512xf32> to vector<8x128xf32>
    %91 = math.tanh %90 : vector<8x128xf32>
    %92 = vector.extract_strided_slice %77 {offsets = [0, 384], sizes = [8, 128], strides = [1, 1]} : vector<8x512xf32> to vector<8x128xf32>
    %93 = arith.negf %92 : vector<8x128xf32>
    %94 = math.exp %93 : vector<8x128xf32>
    %cst_29 = arith.constant 1.000000e+00 : f32
    %95 = vector.broadcast %cst_29 : f32 to vector<8x128xf32>
    %96 = arith.addf %95, %94 : vector<8x128xf32>
    %97 = arith.divf %95, %96 : vector<8x128xf32>
    %98 = arith.mulf %89, %71 : vector<8x128xf32>
    %99 = arith.mulf %83, %91 : vector<8x128xf32>
    %100 = arith.addf %98, %99 : vector<8x128xf32>
    %101 = math.tanh %100 : vector<8x128xf32>
    %102 = arith.mulf %97, %101 : vector<8x128xf32>
    %103 = vector.extract_strided_slice %41 {offsets = [2, 0, 0], sizes = [1, 8, 512], strides = [1, 1, 1]} : vector<4x8x512xf32> to vector<1x8x512xf32>
    %104 = vector.shape_cast %103 : vector<1x8x512xf32> to vector<8x512xf32>
    %cst_30 = arith.constant dense<0.000000e+00> : vector<8x512xf32>
    %105 = tpu.matmul %102, %42, %cst_30 {dimension_numbers = #tpu.dot_dimension_numbers<[1], [0], [0], [1], [0, 0, 1, 1], [], []>} : vector<8x128xf32>, vector<128x512xf32>, vector<8x512xf32> -> vector<8x512xf32>
    %106 = arith.addf %104, %105 : vector<8x512xf32>
    %107 = vector.extract_strided_slice %106 {offsets = [0, 0], sizes = [8, 128], strides = [1, 1]} : vector<8x512xf32> to vector<8x128xf32>
    %108 = arith.negf %107 : vector<8x128xf32>
    %109 = math.exp %108 : vector<8x128xf32>
    %cst_31 = arith.constant 1.000000e+00 : f32
    %110 = vector.broadcast %cst_31 : f32 to vector<8x128xf32>
    %111 = arith.addf %110, %109 : vector<8x128xf32>
    %112 = arith.divf %110, %111 : vector<8x128xf32>
    %113 = vector.extract_strided_slice %106 {offsets = [0, 128], sizes = [8, 128], strides = [1, 1]} : vector<8x512xf32> to vector<8x128xf32>
    %114 = arith.negf %113 : vector<8x128xf32>
    %115 = math.exp %114 : vector<8x128xf32>
    %cst_32 = arith.constant 1.000000e+00 : f32
    %116 = vector.broadcast %cst_32 : f32 to vector<8x128xf32>
    %117 = arith.addf %116, %115 : vector<8x128xf32>
    %118 = arith.divf %116, %117 : vector<8x128xf32>
    %119 = vector.extract_strided_slice %106 {offsets = [0, 256], sizes = [8, 128], strides = [1, 1]} : vector<8x512xf32> to vector<8x128xf32>
    %120 = math.tanh %119 : vector<8x128xf32>
    %121 = vector.extract_strided_slice %106 {offsets = [0, 384], sizes = [8, 128], strides = [1, 1]} : vector<8x512xf32> to vector<8x128xf32>
    %122 = arith.negf %121 : vector<8x128xf32>
    %123 = math.exp %122 : vector<8x128xf32>
    %cst_33 = arith.constant 1.000000e+00 : f32
    %124 = vector.broadcast %cst_33 : f32 to vector<8x128xf32>
    %125 = arith.addf %124, %123 : vector<8x128xf32>
    %126 = arith.divf %124, %125 : vector<8x128xf32>
    %127 = arith.mulf %118, %100 : vector<8x128xf32>
    %128 = arith.mulf %112, %120 : vector<8x128xf32>
    %129 = arith.addf %127, %128 : vector<8x128xf32>
    %130 = math.tanh %129 : vector<8x128xf32>
    %131 = arith.mulf %126, %130 : vector<8x128xf32>
    %132 = vector.extract_strided_slice %41 {offsets = [3, 0, 0], sizes = [1, 8, 512], strides = [1, 1, 1]} : vector<4x8x512xf32> to vector<1x8x512xf32>
    %133 = vector.shape_cast %132 : vector<1x8x512xf32> to vector<8x512xf32>
    %cst_34 = arith.constant dense<0.000000e+00> : vector<8x512xf32>
    %134 = tpu.matmul %131, %42, %cst_34 {dimension_numbers = #tpu.dot_dimension_numbers<[1], [0], [0], [1], [0, 0, 1, 1], [], []>} : vector<8x128xf32>, vector<128x512xf32>, vector<8x512xf32> -> vector<8x512xf32>
    %135 = arith.addf %133, %134 : vector<8x512xf32>
    %136 = vector.extract_strided_slice %135 {offsets = [0, 0], sizes = [8, 128], strides = [1, 1]} : vector<8x512xf32> to vector<8x128xf32>
    %137 = arith.negf %136 : vector<8x128xf32>
    %138 = math.exp %137 : vector<8x128xf32>
    %cst_35 = arith.constant 1.000000e+00 : f32
    %139 = vector.broadcast %cst_35 : f32 to vector<8x128xf32>
    %140 = arith.addf %139, %138 : vector<8x128xf32>
    %141 = arith.divf %139, %140 : vector<8x128xf32>
    %142 = vector.extract_strided_slice %135 {offsets = [0, 128], sizes = [8, 128], strides = [1, 1]} : vector<8x512xf32> to vector<8x128xf32>
    %143 = arith.negf %142 : vector<8x128xf32>
    %144 = math.exp %143 : vector<8x128xf32>
    %cst_36 = arith.constant 1.000000e+00 : f32
    %145 = vector.broadcast %cst_36 : f32 to vector<8x128xf32>
    %146 = arith.addf %145, %144 : vector<8x128xf32>
    %147 = arith.divf %145, %146 : vector<8x128xf32>
    %148 = vector.extract_strided_slice %135 {offsets = [0, 256], sizes = [8, 128], strides = [1, 1]} : vector<8x512xf32> to vector<8x128xf32>
    %149 = math.tanh %148 : vector<8x128xf32>
    %150 = vector.extract_strided_slice %135 {offsets = [0, 384], sizes = [8, 128], strides = [1, 1]} : vector<8x512xf32> to vector<8x128xf32>
    %151 = arith.negf %150 : vector<8x128xf32>
    %152 = math.exp %151 : vector<8x128xf32>
    %cst_37 = arith.constant 1.000000e+00 : f32
    %153 = vector.broadcast %cst_37 : f32 to vector<8x128xf32>
    %154 = arith.addf %153, %152 : vector<8x128xf32>
    %155 = arith.divf %153, %154 : vector<8x128xf32>
    %156 = arith.mulf %147, %129 : vector<8x128xf32>
    %157 = arith.mulf %141, %149 : vector<8x128xf32>
    %158 = arith.addf %156, %157 : vector<8x128xf32>
    %159 = math.tanh %158 : vector<8x128xf32>
    %160 = arith.mulf %155, %159 : vector<8x128xf32>
    %c0_38 = arith.constant 0 : index
    %c0_39 = arith.constant 0 : index
    %161 = vector.load %arg9[%c0_38, %c0_39] : memref<128x128xf32, #tpu.memory_space<vmem>>, vector<128x128xf32>
    %cst_40 = arith.constant dense<0.000000e+00> : vector<8x128xf32>
    %162 = tpu.matmul %160, %161, %cst_40 {dimension_numbers = #tpu.dot_dimension_numbers<[1], [0], [0], [1], [0, 0, 1, 1], [], []>} : vector<8x128xf32>, vector<128x128xf32>, vector<8x128xf32> -> vector<8x128xf32>
    %c0_41 = arith.constant 0 : index
    %c0_42 = arith.constant 0 : index
    %163 = vector.load %arg10[%c0_41, %c0_42] : memref<1x128xf32, #tpu.memory_space<vmem>>, vector<1x128xf32>
    %164 = vector.broadcast %163 : vector<1x128xf32> to vector<8x128xf32>
    %165 = arith.addf %162, %164 : vector<8x128xf32>
    %c0_43 = arith.constant 0 : index
    %c0_44 = arith.constant 0 : index
    %166 = vector.load %arg11[%c0_43, %c0_44] : memref<8x128xf32, #tpu.memory_space<vmem>>, vector<8x128xf32>
    tpu.vector_store %arg11[%c0_43, %c0_44], %165 {strides = array<i32>} : memref<8x128xf32, #tpu.memory_space<vmem>>, vector<8x128xf32>,
    return
  }
  func.func @transform_0(%arg0: i32) -> (i32, i32) {
    %c0_i32 = arith.constant 0 : i32
    %c0_i32_0 = arith.constant 0 : i32
    %c0_i32_1 = arith.constant 0 : i32
    return %c0_i32, %c0_i32_0 : i32, i32
  }
  func.func @transform_1(%arg0: i32) -> (i32, i32) {
    %c0_i32 = arith.constant 0 : i32
    %c0_i32_0 = arith.constant 0 : i32
    %c0_i32_1 = arith.constant 0 : i32
    return %c0_i32, %c0_i32_0 : i32, i32
  }
  func.func @transform_2(%arg0: i32) -> (i32, i32) {
    %c0_i32 = arith.constant 0 : i32
    %c0_i32_0 = arith.constant 0 : i32
    %c0_i32_1 = arith.constant 0 : i32
    return %c0_i32, %c0_i32_0 : i32, i32
  }
  func.func @transform_3(%arg0: i32) -> (i32, i32) {
    %c0_i32 = arith.constant 0 : i32
    %c0_i32_0 = arith.constant 0 : i32
    %c0_i32_1 = arith.constant 0 : i32
    return %c0_i32, %c0_i32_0 : i32, i32
  }
  func.func @transform_4(%arg0: i32) -> (i32, i32) {
    %c0_i32 = arith.constant 0 : i32
    %c0_i32_0 = arith.constant 0 : i32
    %c0_i32_1 = arith.constant 0 : i32
    return %c0_i32, %c0_i32_0 : i32, i32
  }
  func.func @transform_5(%arg0: i32) -> (i32, i32) {
    %c0_i32 = arith.constant 0 : i32
    %c0_i32_0 = arith.constant 0 : i32
    %c0_i32_1 = arith.constant 0 : i32
    return %c0_i32, %c0_i32_0 : i32, i32
  }
  func.func @transform_6(%arg0: i32) -> (i32, i32) {
    %c0_i32 = arith.constant 0 : i32
    %c0_i32_0 = arith.constant 0 : i32
    %c0_i32_1 = arith.constant 0 : i32
    return %c0_i32, %c0_i32_0 : i32, i32
  }
  func.func @transform_7(%arg0: i32) -> (i32, i32) {
    %c0_i32 = arith.constant 0 : i32
    %c0_i32_0 = arith.constant 0 : i32
    %c0_i32_1 = arith.constant 0 : i32
    return %c0_i32, %c0_i32_0 : i32, i32
  }
  func.func @transform_8(%arg0: i32) -> (i32, i32) {
    %c0_i32 = arith.constant 0 : i32
    %c0_i32_0 = arith.constant 0 : i32
    %c0_i32_1 = arith.constant 0 : i32
    return %c0_i32, %c0_i32_0 : i32, i32
  }
  func.func @transform_9(%arg0: i32) -> (i32, i32) {
    %c0_i32 = arith.constant 0 : i32
    %c0_i32_0 = arith.constant 0 : i32
    %c0_i32_1 = arith.constant 0 : i32
    return %c0_i32, %c0_i32_0 : i32, i32
  }
  func.func @transform_10(%arg0: i32) -> (i32, i32) {
    %c0_i32 = arith.constant 0 : i32
    %c0_i32_0 = arith.constant 0 : i32
    %c0_i32_1 = arith.constant 0 : i32
    return %c0_i32, %c0_i32_0 : i32, i32
  }
}

</mosaic_0001>

<llo_original>
// kernel: cnn_lstm_forward.1
$region0: #{cnn_lstm_forward.1}
  #allocation0 [shape = 'u32[]', space=smem, size = 0x4, offset = 0x4, fixed_abs, tag = 'smem constant byte address 0x4 - core index']
  #allocation1 [shape = 'u32[144,128]{1,0:T(1,128)}', space=vmem, size = 0x12000, scoped, tag = 'internal scratch']
  %s0 = inlined_call_operand.vmem [shape: bf16[128,12], index: 0, kind: input, shape index: {}]
  %s1 = inlined_call_operand.vmem [shape: bf16[12,16], index: 1, kind: input, shape index: {}]
  %s2 = inlined_call_operand.vmem [shape: f32[1,16], index: 2, kind: input, shape index: {}]
  %s3 = inlined_call_operand.vmem [shape: bf16[48,32], index: 3, kind: input, shape index: {}]
  %s4 = inlined_call_operand.vmem [shape: f32[1,32], index: 4, kind: input, shape index: {}]
  %s5 = inlined_call_operand.vmem [shape: f32[32,512], index: 5, kind: input, shape index: {}]
  %s6 = inlined_call_operand.vmem [shape: f32[128,512], index: 6, kind: input, shape index: {}]
  %s7 = inlined_call_operand.vmem [shape: f32[1,512], index: 7, kind: input, shape index: {}]
  %s8 = inlined_call_operand.vmem [shape: f32[128,128], index: 8, kind: input, shape index: {}]
  %s9 = inlined_call_operand.vmem [shape: f32[1,128], index: 9, kind: input, shape index: {}]
  %s10 = inlined_call_operand.vmem [shape: f32[8,128], index: 10, kind: output, shape index: {}]
  %s11 = sld [smem:[#allocation0]]
  $region50: #{cnn_lstm_forward.1} parent=0
    _
  %s13 = ssub.s32 1, %s11
  %s14 = scalar_select 0, %s13, %s11
  // Predicated region
  $region2: #{cnn_lstm_forward.1} parent=0 // pred_check
    _
  $region3: #{cnn_lstm_forward.1} parent=0 // pred_check_branch
    %16 = sbr.rel (0) target = $region5
  $region4: #{cnn_lstm_forward.1} parent=0 // pred_region
    _
  $region5: #{cnn_lstm_forward.1} parent=0 // pred_fallthru
    _
  // Predicated region
  $region6: #{cnn_lstm_forward.1} parent=0 // pred_check
    _
  $region7: #{cnn_lstm_forward.1} parent=0 // pred_check_branch
    %18 = sbr.rel (0) target = $region9
  $region8: #{cnn_lstm_forward.1} parent=0 // pred_region
    _
  $region9: #{cnn_lstm_forward.1} parent=0 // pred_fallthru
    _
  // Predicated region
  $region10: #{cnn_lstm_forward.1} parent=0 // pred_check
    _
  $region11: #{cnn_lstm_forward.1} parent=0 // pred_check_branch
    %20 = sbr.rel (0) target = $region13
  $region12: #{cnn_lstm_forward.1} parent=0 // pred_region
    _
  $region13: #{cnn_lstm_forward.1} parent=0 // pred_fallthru
    _
  // Predicated region
  $region14: #{cnn_lstm_forward.1} parent=0 // pred_check
    _
  $region15: #{cnn_lstm_forward.1} parent=0 // pred_check_branch
    %22 = sbr.rel (0) target = $region17
  $region16: #{cnn_lstm_forward.1} parent=0 // pred_region
    _
  $region17: #{cnn_lstm_forward.1} parent=0 // pred_fallthru
    _
  // Predicated region
  $region18: #{cnn_lstm_forward.1} parent=0 // pred_check
    _
  $region19: #{cnn_lstm_forward.1} parent=0 // pred_check_branch
    %24 = sbr.rel (0) target = $region21
  $region20: #{cnn_lstm_forward.1} parent=0 // pred_region
    _
  $region21: #{cnn_lstm_forward.1} parent=0 // pred_fallthru
    _
  // Predicated region
  $region22: #{cnn_lstm_forward.1} parent=0 // pred_check
    _
  $region23: #{cnn_lstm_forward.1} parent=0 // pred_check_branch
    %26 = sbr.rel (0) target = $region25
  $region24: #{cnn_lstm_forward.1} parent=0 // pred_region
    _
  $region25: #{cnn_lstm_forward.1} parent=0 // pred_fallthru
    _
  // Predicated region
  $region26: #{cnn_lstm_forward.1} parent=0 // pred_check
    _
  $region27: #{cnn_lstm_forward.1} parent=0 // pred_check_branch
    %28 = sbr.rel (0) target = $region29
  $region28: #{cnn_lstm_forward.1} parent=0 // pred_region
    _
  $region29: #{cnn_lstm_forward.1} parent=0 // pred_fallthru
    _
  // Predicated region
  $region30: #{cnn_lstm_forward.1} parent=0 // pred_check
    _
  $region31: #{cnn_lstm_forward.1} parent=0 // pred_check_branch
    %30 = sbr.rel (0) target = $region33
  $region32: #{cnn_lstm_forward.1} parent=0 // pred_region
    _
  $region33: #{cnn_lstm_forward.1} parent=0 // pred_fallthru
    _
  // Predicated region
  $region34: #{cnn_lstm_forward.1} parent=0 // pred_check
    _
  $region35: #{cnn_lstm_forward.1} parent=0 // pred_check_branch
    %32 = sbr.rel (0) target = $region37
  $region36: #{cnn_lstm_forward.1} parent=0 // pred_region
    _
  $region37: #{cnn_lstm_forward.1} parent=0 // pred_fallthru
    _
  // Predicated region
  $region38: #{cnn_lstm_forward.1} parent=0 // pred_check
    _
  $region39: #{cnn_lstm_forward.1} parent=0 // pred_check_branch
    %34 = sbr.rel (0) target = $region41
  $region40: #{cnn_lstm_forward.1} parent=0 // pred_region
    _
  $region41: #{cnn_lstm_forward.1} parent=0 // pred_fallthru
    _
  %v36 = vld [vmem:[%s0] sm:$0xf]
  %v37 = vld [vmem:[%s0 + $0x4] sm:$0xf]
  %v38 = vld [vmem:[%s0 + $0x8] sm:$0xf]
  %v39 = vld [vmem:[%s0 + $0xc] sm:$0xf]
  %v40 = vld [vmem:[%s0 + $0x10] sm:$0xf]
  %v41 = vld [vmem:[%s0 + $0x14] sm:$0xf]
  %v42 = vld [vmem:[%s0 + $0x18] sm:$0xf]
  %v43 = vld [vmem:[%s0 + $0x1c] sm:$0xf]
  %v44 = vld [vmem:[%s0 + $0x20] sm:$0xf]
  %v45 = vld [vmem:[%s0 + $0x24] sm:$0xf]
  %v46 = vld [vmem:[%s0 + $0x28] sm:$0xf]
  %v47 = vld [vmem:[%s0 + $0x2c] sm:$0xf]
  %v48 = vld [vmem:[%s0 + $0x30] sm:$0xf]
  %v49 = vld [vmem:[%s0 + $0x34] sm:$0xf]
  %v50 = vld [vmem:[%s0 + $0x38] sm:$0xf]
  %v51 = vld [vmem:[%s0 + $0x3c] sm:$0xf]
  %v52 = vld [vmem:[%s1] sm:$0xf]
  %v53 = vld [vmem:[%s1 + $0x4] sm:$0x3]
  %v54 = vld [vmem:[%s2] sm:$0x1]
  %v56 = vlaneseq
  %v57 = vshrl.u32 %v56, 7
  %v58 = vsub.s32 0, %v57
  %v59 = vrot.slane %v54, %v58
  %v77 = vunpack.c.l.b16 %v36
  %v78 = vunpack.c.l.b16 %v37
  %v79 = vunpack.c.l.b16 %v38
  %v80 = vunpack.c.l.b16 %v39
  %v81 = vunpack.c.l.b16 %v40
  %v82 = vunpack.c.l.b16 %v41
  %v83 = vunpack.c.l.b16 %v42
  %v84 = vunpack.c.l.b16 %v43
  %v85 = vunpack.c.l.b16 %v44
  %v86 = vunpack.c.l.b16 %v45
  %v87 = vunpack.c.l.b16 %v46
  %v88 = vunpack.c.l.b16 %v47
  %v89 = vunpack.c.l.b16 %v48
  %v90 = vunpack.c.l.b16 %v49
  %v91 = vunpack.c.l.b16 %v50
  %v92 = vunpack.c.l.b16 %v51
  %v93 = vpack.c.b16 %v78, %v77
  %v94 = vpack.c.b16 %v80, %v79
  %v95 = vpack.c.b16 %v82, %v81
  %v96 = vpack.c.b16 %v84, %v83
  %v97 = vpack.c.b16 %v86, %v85
  %v98 = vpack.c.b16 %v88, %v87
  %v99 = vpack.c.b16 %v90, %v89
  %v100 = vpack.c.b16 %v92, %v91
  %v103 = vunpack.c.l.b16 %v52
  %v104 = vunpack.c.l.b16 %v53
  %v105 = vpack.c.b16 %v104, %v103
  %vm106 = vcmask 97280
  %v108 = vsel %vm106, %v93, 0
  %v111 = vsel %vm106, %v94, 0
  %v114 = vsel %vm106, %v95, 0
  %v117 = vsel %vm106, %v96, 0
  %v120 = vsel %vm106, %v97, 0
  %v123 = vsel %vm106, %v98, 0
  %v126 = vsel %vm106, %v99, 0
  %v129 = vsel %vm106, %v100, 0
  %vm131 = vcmask 1045504
  %v133 = vsel %vm131, %v105, 0
  %135 = vmatprep.subr.bf16.mxu0 0
  %136 = vmatpush1.bf16.msra.mxu0 %v133
  %137 = vmatprep.subr.bf16.mxu0 0
  %138 = vmatpush1.bf16.msra.mxu0 0
  %139 = vmatprep.subr.bf16.mxu0 0
  %140 = vmatpush1.bf16.msra.mxu0 0
  %141 = vmatprep.subr.bf16.mxu0 0
  %142 = vmatpush1.bf16.msra.mxu0 0
  %143 = vmatprep.subr.bf16.mxu0 0
  %144 = vmatpush1.bf16.msra.mxu0 0
  %145 = vmatprep.subr.bf16.mxu0 0
  %146 = vmatpush1.bf16.msra.mxu0 0
  %147 = vmatprep.subr.bf16.mxu0 0
  %148 = vmatpush1.bf16.msra.mxu0 0
  %149 = vmatprep.subr.bf16.mxu0 0
  %150 = vmatpush1.bf16.msra.mxu0 0
  %151 = vmatprep.subr.bf16.mxu0 0
  %152 = vmatpush1.bf16.msra.mxu0 0
  %153 = vmatprep.subr.bf16.mxu0 0
  %154 = vmatpush1.bf16.msra.mxu0 0
  %155 = vmatprep.subr.bf16.mxu0 0
  %156 = vmatpush1.bf16.msra.mxu0 0
  %157 = vmatprep.subr.bf16.mxu0 0
  %158 = vmatpush1.bf16.msra.mxu0 0
  %159 = vmatprep.subr.bf16.mxu0 0
  %160 = vmatpush1.bf16.msra.mxu0 0
  %161 = vmatprep.subr.bf16.mxu0 0
  %162 = vmatpush1.bf16.msra.mxu0 0
  %163 = vmatprep.subr.bf16.mxu0 0
  %164 = vmatpush1.bf16.msra.mxu0 0
  %165 = vmatprep.subr.bf16.mxu0 0
  %166 = vmatpush1.bf16.msra.mxu0 0
  %167 = vmatprep.mubr.bf16.mxu0 0
  %168 = vmatmul.mubr.bf16.gmra.mrb[0].mxu0 %v108
  %v169 = vpop.f32.mrb[0].mxu0
  %v170 = vadd.f32 %v59, %v169
  %v171 = vpop.f32.mrb[0].mxu0
  %v172 = vpop.f32.mrb[0].mxu0
  %v173 = vadd.f32 %v59, %v172
  %v174 = vpop.f32.mrb[0].mxu0
  %175 = vmatprep.mubr.bf16.mxu0 0
  %176 = vmatmul.mubr.bf16.gmra.mrb[0].mxu0 %v111
  %v177 = vpop.f32.mrb[0].mxu0
  %v178 = vadd.f32 %v59, %v177
  %v179 = vpop.f32.mrb[0].mxu0
  %v180 = vpop.f32.mrb[0].mxu0
  %v181 = vadd.f32 %v59, %v180
  %v182 = vpop.f32.mrb[0].mxu0
  %183 = vmatprep.mubr.bf16.mxu0 0
  %184 = vmatmul.mubr.bf16.gmra.mrb[0].mxu0 %v114
  %v185 = vpop.f32.mrb[0].mxu0
  %v186 = vadd.f32 %v59, %v185
  %v187 = vpop.f32.mrb[0].mxu0
  %v188 = vpop.f32.mrb[0].mxu0
  %v189 = vadd.f32 %v59, %v188
  %v190 = vpop.f32.mrb[0].mxu0
  %191 = vmatprep.mubr.bf16.mxu0 0
  %192 = vmatmul.mubr.bf16.gmra.mrb[0].mxu0 %v117
  %v193 = vpop.f32.mrb[0].mxu0
  %v194 = vadd.f32 %v59, %v193
  %v195 = vpop.f32.mrb[0].mxu0
  %v196 = vpop.f32.mrb[0].mxu0
  %v197 = vadd.f32 %v59, %v196
  %v198 = vpop.f32.mrb[0].mxu0
  %199 = vmatprep.mubr.bf16.mxu0 0
  %200 = vmatmul.mubr.bf16.gmra.mrb[0].mxu0 %v120
  %v201 = vpop.f32.mrb[0].mxu0
  %v202 = vadd.f32 %v59, %v201
  %v203 = vpop.f32.mrb[0].mxu0
  %v204 = vpop.f32.mrb[0].mxu0
  %v205 = vadd.f32 %v59, %v204
  %v206 = vpop.f32.mrb[0].mxu0
  %207 = vmatprep.mubr.bf16.mxu0 0
  %208 = vmatmul.mubr.bf16.gmra.mrb[0].mxu0 %v123
  %v209 = vpop.f32.mrb[0].mxu0
  %v210 = vadd.f32 %v59, %v209
  %v211 = vpop.f32.mrb[0].mxu0
  %v212 = vpop.f32.mrb[0].mxu0
  %v213 = vadd.f32 %v59, %v212
  %v214 = vpop.f32.mrb[0].mxu0
  %215 = vmatprep.mubr.bf16.mxu0 0
  %216 = vmatmul.mubr.bf16.gmra.mrb[0].mxu0 %v126
  %v217 = vpop.f32.mrb[0].mxu0
  %v218 = vadd.f32 %v59, %v217
  %v219 = vpop.f32.mrb[0].mxu0
  %v220 = vpop.f32.mrb[0].mxu0
  %v221 = vadd.f32 %v59, %v220
  %v222 = vpop.f32.mrb[0].mxu0
  %223 = vmatprep.mubr.bf16.mxu0 0
  %224 = vmatmul.mubr.bf16.gmra.mrb[0].mxu0 %v129
  %v225 = vpop.f32.mrb[0].mxu0
  %v226 = vadd.f32 %v59, %v225
  %v227 = vpop.f32.mrb[0].mxu0
  %v228 = vpop.f32.mrb[0].mxu0
  %v229 = vadd.f32 %v59, %v228
  %v230 = vpop.f32.mrb[0].mxu0
  %231 = vdwg.mxu0
  %v232 = vmax.f32 %v170, 0.0
  %v233 = vmax.f32 %v173, 0.0
  %v234 = vmax.f32 %v178, 0.0
  %v235 = vmax.f32 %v181, 0.0
  %v236 = vmax.f32 %v186, 0.0
  %v237 = vmax.f32 %v189, 0.0
  %v238 = vmax.f32 %v194, 0.0
  %v239 = vmax.f32 %v197, 0.0
  %v240 = vmax.f32 %v202, 0.0
  %v241 = vmax.f32 %v205, 0.0
  %v242 = vmax.f32 %v210, 0.0
  %v243 = vmax.f32 %v213, 0.0
  %v244 = vmax.f32 %v218, 0.0
  %v245 = vmax.f32 %v221, 0.0
  %v246 = vmax.f32 %v226, 0.0
  %v247 = vmax.f32 %v229, 0.0
  %v248 = vmax.f32 %v232, %v233
  %v249 = vmax.f32 %v234, %v235
  %v250 = vmax.f32 %v236, %v237
  %v251 = vmax.f32 %v238, %v239
  %v252 = vmax.f32 %v240, %v241
  %v253 = vmax.f32 %v242, %v243
  %v254 = vmax.f32 %v244, %v245
  %v255 = vmax.f32 %v246, %v247
  %264 = vrot.lane.b32.xlu0 %v248, 16
  %v265 = vpop.permute.xlu0 %264
  %266 = vrot.lane.b32.xlu0 %v249, 16
  %v267 = vpop.permute.xlu0 %266
  %268 = vrot.lane.b32.xlu0 %v250, 16
  %v269 = vpop.permute.xlu0 %268
  %270 = vrot.lane.b32.xlu0 %v251, 16
  %v271 = vpop.permute.xlu0 %270
  %272 = vrot.lane.b32.xlu0 %v252, 16
  %v273 = vpop.permute.xlu0 %272
  %274 = vrot.lane.b32.xlu0 %v253, 16
  %v275 = vpop.permute.xlu0 %274
  %276 = vrot.lane.b32.xlu0 %v254, 16
  %v277 = vpop.permute.xlu0 %276
  %278 = vrot.lane.b32.xlu0 %v255, 16
  %v279 = vpop.permute.xlu0 %278
  %289 = vrot.lane.b32.xlu0 %v249, 32
  %v290 = vpop.permute.xlu0 %289
  %291 = vrot.lane.b32.xlu0 %v250, 32
  %v292 = vpop.permute.xlu0 %291
  %293 = vrot.lane.b32.xlu0 %v251, 32
  %v294 = vpop.permute.xlu0 %293
  %295 = vrot.lane.b32.xlu0 %v252, 32
  %v296 = vpop.permute.xlu0 %295
  %297 = vrot.lane.b32.xlu0 %v253, 32
  %v298 = vpop.permute.xlu0 %297
  %299 = vrot.lane.b32.xlu0 %v254, 32
  %v300 = vpop.permute.xlu0 %299
  %301 = vrot.lane.b32.xlu0 %v255, 32
  %v302 = vpop.permute.xlu0 %301
  %303 = vrot.lane.b32.xlu0 0.0, 32
  %v304 = vpop.permute.xlu0 %303
  %vm313 = vcmask 130048
  %v314 = vsel %vm313, 0.0, %v265
  %v315 = vsel %vm313, %v248, %v267
  %v316 = vsel %vm313, %v249, %v269
  %v317 = vsel %vm313, %v250, %v271
  %v318 = vsel %vm313, %v251, %v273
  %v319 = vsel %vm313, %v252, %v275
  %v320 = vsel %vm313, %v253, %v277
  %v321 = vsel %vm313, %v254, %v279
  %vm322 = vcmask 261120
  %v323 = vsel %vm322, %v314, %v290
  %v324 = vsel %vm322, %v315, %v292
  %v325 = vsel %vm322, %v316, %v294
  %v326 = vsel %vm322, %v317, %v296
  %v327 = vsel %vm322, %v318, %v298
  %v328 = vsel %vm322, %v319, %v300
  %v329 = vsel %vm322, %v320, %v302
  %v330 = vsel %vm322, %v321, %v304
  %v331 = vpack.c.bf16 %v324, %v323
  %v332 = vpack.c.bf16 %v326, %v325
  %v333 = vpack.c.bf16 %v328, %v327
  %v334 = vpack.c.bf16 %v330, %v329
  %v335 = vld [vmem:[%s3] sm:$0xf]
  %v336 = vld [vmem:[%s3 + $0x4] sm:$0xf]
  %v337 = vld [vmem:[%s3 + $0x8] sm:$0xf]
  %v338 = vld [vmem:[%s3 + $0xc] sm:$0xf]
  %v339 = vld [vmem:[%s3 + $0x10] sm:$0xf]
  %v340 = vld [vmem:[%s3 + $0x14] sm:$0xf]
  %v341 = vld [vmem:[%s4] sm:$0x1]
  %v343 = vlaneseq
  %v344 = vshrl.u32 %v343, 7
  %v345 = vsub.s32 0, %v344
  %v346 = vrot.slane %v341, %v345
  %v354 = vunpack.c.l.b16 %v335
  %v355 = vunpack.c.l.b16 %v336
  %v356 = vunpack.c.l.b16 %v337
  %v357 = vunpack.c.l.b16 %v338
  %v358 = vunpack.c.l.b16 %v339
  %v359 = vunpack.c.l.b16 %v340
  %v360 = vpack.c.b16 %v355, %v354
  %v361 = vpack.c.b16 %v357, %v356
  %v362 = vpack.c.b16 %v359, %v358
  %vm366 = vcmask 392192
  %v368 = vsel %vm366, %v331, 0
  %v371 = vsel %vm366, %v332, 0
  %v374 = vsel %vm366, %v333, 0
  %v377 = vsel %vm366, %v334, 0
  %379 = vmatprep.subr.bf16.mxu0 0
  %380 = vmatpush1.bf16.msra.mxu0 %v360
  %381 = vmatprep.subr.bf16.mxu0 0
  %382 = vmatpush1.bf16.msra.mxu0 %v361
  %383 = vmatprep.subr.bf16.mxu0 0
  %384 = vmatpush1.bf16.msra.mxu0 %v362
  %385 = vmatprep.subr.bf16.mxu0 0
  %386 = vmatpush1.bf16.msra.mxu0 0
  %387 = vmatprep.subr.bf16.mxu0 0
  %388 = vmatpush1.bf16.msra.mxu0 0
  %389 = vmatprep.subr.bf16.mxu0 0
  %390 = vmatpush1.bf16.msra.mxu0 0
  %391 = vmatprep.subr.bf16.mxu0 0
  %392 = vmatpush1.bf16.msra.mxu0 0
  %393 = vmatprep.subr.bf16.mxu0 0
  %394 = vmatpush1.bf16.msra.mxu0 0
  %395 = vmatprep.subr.bf16.mxu0 0
  %396 = vmatpush1.bf16.msra.mxu0 0
  %397 = vmatprep.subr.bf16.mxu0 0
  %398 = vmatpush1.bf16.msra.mxu0 0
  %399 = vmatprep.subr.bf16.mxu0 0
  %400 = vmatpush1.bf16.msra.mxu0 0
  %401 = vmatprep.subr.bf16.mxu0 0
  %402 = vmatpush1.bf16.msra.mxu0 0
  %403 = vmatprep.subr.bf16.mxu0 0
  %404 = vmatpush1.bf16.msra.mxu0 0
  %405 = vmatprep.subr.bf16.mxu0 0
  %406 = vmatpush1.bf16.msra.mxu0 0
  %407 = vmatprep.subr.bf16.mxu0 0
  %408 = vmatpush1.bf16.msra.mxu0 0
  %409 = vmatprep.subr.bf16.mxu0 0
  %410 = vmatpush1.bf16.msra.mxu0 0
  %411 = vmatprep.mubr.bf16.mxu0 0
  %412 = vmatmul.mubr.bf16.gmra.mrb[0].mxu0 %v368
  %v413 = vpop.f32.mrb[0].mxu0
  %v414 = vadd.f32 %v346, %v413
  %v415 = vpop.f32.mrb[0].mxu0
  %v416 = vpop.f32.mrb[0].mxu0
  %v417 = vadd.f32 %v346, %v416
  %v418 = vpop.f32.mrb[0].mxu0
  %419 = vmatprep.mubr.bf16.mxu0 0
  %420 = vmatmul.mubr.bf16.gmra.mrb[0].mxu0 %v371
  %v421 = vpop.f32.mrb[0].mxu0
  %v422 = vadd.f32 %v346, %v421
  %v423 = vpop.f32.mrb[0].mxu0
  %v424 = vpop.f32.mrb[0].mxu0
  %v425 = vadd.f32 %v346, %v424
  %v426 = vpop.f32.mrb[0].mxu0
  %427 = vmatprep.mubr.bf16.mxu0 0
  %428 = vmatmul.mubr.bf16.gmra.mrb[0].mxu0 %v374
  %v429 = vpop.f32.mrb[0].mxu0
  %v430 = vadd.f32 %v346, %v429
  %v431 = vpop.f32.mrb[0].mxu0
  %v432 = vpop.f32.mrb[0].mxu0
  %v433 = vadd.f32 %v346, %v432
  %v434 = vpop.f32.mrb[0].mxu0
  %435 = vmatprep.mubr.bf16.mxu0 0
  %436 = vmatmul.mubr.bf16.gmra.mrb[0].mxu0 %v377
  %v437 = vpop.f32.mrb[0].mxu0
  %v438 = vadd.f32 %v346, %v437
  %v439 = vpop.f32.mrb[0].mxu0
  %v440 = vpop.f32.mrb[0].mxu0
  %v441 = vadd.f32 %v346, %v440
  %v442 = vpop.f32.mrb[0].mxu0
  %443 = vdwg.mxu0
  %v444 = vmax.f32 %v414, 0.0
  %v445 = vmax.f32 %v417, 0.0
  %v446 = vmax.f32 %v422, 0.0
  %v447 = vmax.f32 %v425, 0.0
  %v448 = vmax.f32 %v430, 0.0
  %v449 = vmax.f32 %v433, 0.0
  %v450 = vmax.f32 %v438, 0.0
  %v451 = vmax.f32 %v441, 0.0
  %v452 = vmax.f32 %v444, %v445
  %v453 = vmax.f32 %v446, %v447
  %v454 = vmax.f32 %v448, %v449
  %v455 = vmax.f32 %v450, %v451
  %v456 = vld [vmem:[%s5] sm:$0xff]
  %v457 = vld [vmem:[%s5 + $0x8] sm:$0xff]
  %v458 = vld [vmem:[%s5 + $0x10] sm:$0xff]
  %v459 = vld [vmem:[%s5 + $0x18] sm:$0xff]
  %v460 = vld [vmem:[%s5 + $0x20] sm:$0xff]
  %v461 = vld [vmem:[%s5 + $0x28] sm:$0xff]
  %v462 = vld [vmem:[%s5 + $0x30] sm:$0xff]
  %v463 = vld [vmem:[%s5 + $0x38] sm:$0xff]
  %v464 = vld [vmem:[%s5 + $0x40] sm:$0xff]
  %v465 = vld [vmem:[%s5 + $0x48] sm:$0xff]
  %v466 = vld [vmem:[%s5 + $0x50] sm:$0xff]
  %v467 = vld [vmem:[%s5 + $0x58] sm:$0xff]
  %v468 = vld [vmem:[%s5 + $0x60] sm:$0xff]
  %v469 = vld [vmem:[%s5 + $0x68] sm:$0xff]
  %v470 = vld [vmem:[%s5 + $0x70] sm:$0xff]
  %v471 = vld [vmem:[%s5 + $0x78] sm:$0xff]
  %v472 = vld [vmem:[%s7] sm:$0xf]
  %v474 = vlaneseq
  %v475 = vshrl.u32 %v474, 7
  %v476 = vsub.s32 0, %v475
  %v477 = vrot.slane %v472, %v476
  %v478 = vlaneseq
  %v479 = vshrl.u32 %v478, 7
  %v480 = vsub.s32 1, %v479
  %v481 = vrot.slane %v472, %v480
  %v482 = vlaneseq
  %v483 = vshrl.u32 %v482, 7
  %v484 = vsub.s32 2, %v483
  %v485 = vrot.slane %v472, %v484
  %v486 = vlaneseq
  %v487 = vshrl.u32 %v486, 7
  %v488 = vsub.s32 3, %v487
  %v489 = vrot.slane %v472, %v488
  %v495 = vsel %vm322, %v452, 0
  %v498 = vsel %vm322, %v453, 0
  %v501 = vsel %vm322, %v454, 0
  %v504 = vsel %vm322, %v455, 0
  %506 = vmatprep.subr.mxu0 %v457
  %507 = vmatpush1.msra.mxu0 %v456
  %508 = vmatprep.subr.mxu0 %v461
  %509 = vmatpush1.msra.mxu0 %v460
  %510 = vmatprep.subr.mxu0 %v465
  %511 = vmatpush1.msra.mxu0 %v464
  %512 = vmatprep.subr.mxu0 %v469
  %513 = vmatpush1.msra.mxu0 %v468
  %514 = vmatprep.subr.mxu0 0.0
  %515 = vmatpush1.msra.mxu0 0.0
  %516 = vmatprep.subr.mxu0 0.0
  %517 = vmatpush1.msra.mxu0 0.0
  %518 = vmatprep.subr.mxu0 0.0
  %519 = vmatpush1.msra.mxu0 0.0
  %520 = vmatprep.subr.mxu0 0.0
  %521 = vmatpush1.msra.mxu0 0.0
  %522 = vmatprep.subr.mxu0 0.0
  %523 = vmatpush1.msra.mxu0 0.0
  %524 = vmatprep.subr.mxu0 0.0
  %525 = vmatpush1.msra.mxu0 0.0
  %526 = vmatprep.subr.mxu0 0.0
  %527 = vmatpush1.msra.mxu0 0.0
  %528 = vmatprep.subr.mxu0 0.0
  %529 = vmatpush1.msra.mxu0 0.0
  %530 = vmatprep.subr.mxu0 0.0
  %531 = vmatpush1.msra.mxu0 0.0
  %532 = vmatprep.subr.mxu0 0.0
  %533 = vmatpush1.msra.mxu0 0.0
  %534 = vmatprep.subr.mxu0 0.0
  %535 = vmatpush1.msra.mxu0 0.0
  %536 = vmatprep.subr.mxu0 0.0
  %537 = vmatpush1.msra.mxu0 0.0
  %538 = vmatprep.subr.mxu0 0.0
  %539 = vmatpush1.msra.mxu0 0.0
  %540 = vmatprep.subr.mxu0 0.0
  %541 = vmatpush1.msra.mxu0 0.0
  %542 = vmatprep.subr.mxu0 0.0
  %543 = vmatpush1.msra.mxu0 0.0
  %544 = vmatprep.subr.mxu0 0.0
  %545 = vmatpush1.msra.mxu0 0.0
  %546 = vmatprep.subr.mxu0 0.0
  %547 = vmatpush1.msra.mxu0 0.0
  %548 = vmatprep.subr.mxu0 0.0
  %549 = vmatpush1.msra.mxu0 0.0
  %550 = vmatprep.subr.mxu0 0.0
  %551 = vmatpush1.msra.mxu0 0.0
  %552 = vmatprep.subr.mxu0 0.0
  %553 = vmatpush1.msra.mxu0 0.0
  %554 = vmatprep.subr.mxu0 0.0
  %555 = vmatpush1.msra.mxu0 0.0
  %556 = vmatprep.subr.mxu0 0.0
  %557 = vmatpush1.msra.mxu0 0.0
  %558 = vmatprep.subr.mxu0 0.0
  %559 = vmatpush1.msra.mxu0 0.0
  %560 = vmatprep.subr.mxu0 0.0
  %561 = vmatpush1.msra.mxu0 0.0
  %562 = vmatprep.subr.mxu0 0.0
  %563 = vmatpush1.msra.mxu0 0.0
  %564 = vmatprep.subr.mxu0 0.0
  %565 = vmatpush1.msra.mxu0 0.0
  %566 = vmatprep.subr.mxu0 0.0
  %567 = vmatpush1.msra.mxu0 0.0
  %568 = vmatprep.subr.mxu0 0.0
  %569 = vmatpush1.msra.mxu0 0.0
  %570 = vmatprep.mubr.f32.mxu0 0.0
  %571 = vmatmul.mubr.f32.gmra.mrb[0].mxu0 %v495
  %v572 = vpop.f32.mrb[0].mxu0
  %v573 = vadd.f32 %v477, %v572
  %v574 = vpop.f32.mrb[0].mxu0
  %v575 = vadd.f32 %v481, %v574
  %576 = vmatprep.mubr.f32.mxu0 0.0
  %577 = vmatmul.mubr.f32.gmra.mrb[0].mxu0 %v498
  %v578 = vpop.f32.mrb[0].mxu0
  %v579 = vadd.f32 %v477, %v578
  %v580 = vpop.f32.mrb[0].mxu0
  %v581 = vadd.f32 %v481, %v580
  %582 = vmatprep.mubr.f32.mxu0 0.0
  %583 = vmatmul.mubr.f32.gmra.mrb[0].mxu0 %v501
  %v584 = vpop.f32.mrb[0].mxu0
  %v585 = vadd.f32 %v477, %v584
  %v586 = vpop.f32.mrb[0].mxu0
  %v587 = vadd.f32 %v481, %v586
  %588 = vmatprep.mubr.f32.mxu0 0.0
  %589 = vmatmul.mubr.f32.gmra.mrb[0].mxu0 %v504
  %v590 = vpop.f32.mrb[0].mxu0
  %v591 = vadd.f32 %v477, %v590
  %v592 = vpop.f32.mrb[0].mxu0
  %v593 = vadd.f32 %v481, %v592
  %594 = vdwg.mxu0
  %595 = vmatprep.subr.mxu0 %v459
  %596 = vmatpush1.msra.mxu0 %v458
  %597 = vmatprep.subr.mxu0 %v463
  %598 = vmatpush1.msra.mxu0 %v462
  %599 = vmatprep.subr.mxu0 %v467
  %600 = vmatpush1.msra.mxu0 %v466
  %601 = vmatprep.subr.mxu0 %v471
  %602 = vmatpush1.msra.mxu0 %v470
  %603 = vmatprep.subr.mxu0 0.0
  %604 = vmatpush1.msra.mxu0 0.0
  %605 = vmatprep.subr.mxu0 0.0
  %606 = vmatpush1.msra.mxu0 0.0
  %607 = vmatprep.subr.mxu0 0.0
  %608 = vmatpush1.msra.mxu0 0.0
  %609 = vmatprep.subr.mxu0 0.0
  %610 = vmatpush1.msra.mxu0 0.0
  %611 = vmatprep.subr.mxu0 0.0
  %612 = vmatpush1.msra.mxu0 0.0
  %613 = vmatprep.subr.mxu0 0.0
  %614 = vmatpush1.msra.mxu0 0.0
  %615 = vmatprep.subr.mxu0 0.0
  %616 = vmatpush1.msra.mxu0 0.0
  %617 = vmatprep.subr.mxu0 0.0
  %618 = vmatpush1.msra.mxu0 0.0
  %619 = vmatprep.subr.mxu0 0.0
  %620 = vmatpush1.msra.mxu0 0.0
  %621 = vmatprep.subr.mxu0 0.0
  %622 = vmatpush1.msra.mxu0 0.0
  %623 = vmatprep.subr.mxu0 0.0
  %624 = vmatpush1.msra.mxu0 0.0
  %625 = vmatprep.subr.mxu0 0.0
  %626 = vmatpush1.msra.mxu0 0.0
  %627 = vmatprep.subr.mxu0 0.0
  %628 = vmatpush1.msra.mxu0 0.0
  %629 = vmatprep.subr.mxu0 0.0
  %630 = vmatpush1.msra.mxu0 0.0
  %631 = vmatprep.subr.mxu0 0.0
  %632 = vmatpush1.msra.mxu0 0.0
  %633 = vmatprep.subr.mxu0 0.0
  %634 = vmatpush1.msra.mxu0 0.0
  %635 = vmatprep.subr.mxu0 0.0
  %636 = vmatpush1.msra.mxu0 0.0
  %637 = vmatprep.subr.mxu0 0.0
  %638 = vmatpush1.msra.mxu0 0.0
  %639 = vmatprep.subr.mxu0 0.0
  %640 = vmatpush1.msra.mxu0 0.0
  %641 = vmatprep.subr.mxu0 0.0
  %642 = vmatpush1.msra.mxu0 0.0
  %643 = vmatprep.subr.mxu0 0.0
  %644 = vmatpush1.msra.mxu0 0.0
  %645 = vmatprep.subr.mxu0 0.0
  %646 = vmatpush1.msra.mxu0 0.0
  %647 = vmatprep.subr.mxu0 0.0
  %648 = vmatpush1.msra.mxu0 0.0
  %649 = vmatprep.subr.mxu0 0.0
  %650 = vmatpush1.msra.mxu0 0.0
  %651 = vmatprep.subr.mxu0 0.0
  %652 = vmatpush1.msra.mxu0 0.0
  %653 = vmatprep.subr.mxu0 0.0
  %654 = vmatpush1.msra.mxu0 0.0
  %655 = vmatprep.subr.mxu0 0.0
  %656 = vmatpush1.msra.mxu0 0.0
  %657 = vmatprep.subr.mxu0 0.0
  %658 = vmatpush1.msra.mxu0 0.0
  %659 = vmatprep.mubr.f32.mxu0 0.0
  %660 = vmatmul.mubr.f32.gmra.mrb[0].mxu0 %v495
  %v661 = vpop.f32.mrb[0].mxu0
  %v662 = vadd.f32 %v485, %v661
  %v663 = vpop.f32.mrb[0].mxu0
  %v664 = vadd.f32 %v489, %v663
  %665 = vmatprep.mubr.f32.mxu0 0.0
  %666 = vmatmul.mubr.f32.gmra.mrb[0].mxu0 %v498
  %v667 = vpop.f32.mrb[0].mxu0
  %v668 = vadd.f32 %v485, %v667
  %v669 = vpop.f32.mrb[0].mxu0
  %v670 = vadd.f32 %v489, %v669
  %671 = vmatprep.mubr.f32.mxu0 0.0
  %672 = vmatmul.mubr.f32.gmra.mrb[0].mxu0 %v501
  %v673 = vpop.f32.mrb[0].mxu0
  %v674 = vadd.f32 %v485, %v673
  %v675 = vpop.f32.mrb[0].mxu0
  %v676 = vadd.f32 %v489, %v675
  %677 = vmatprep.mubr.f32.mxu0 0.0
  %678 = vmatmul.mubr.f32.gmra.mrb[0].mxu0 %v504
  %v679 = vpop.f32.mrb[0].mxu0
  %v680 = vadd.f32 %v485, %v679
  %v681 = vpop.f32.mrb[0].mxu0
  %v682 = vadd.f32 %v489, %v681
  %683 = vdwg.mxu0
  %v684 = vld [vmem:[%s6] sm:$0xff]
  %v685 = vld [vmem:[%s6 + $0x8] sm:$0xff]
  %v686 = vld [vmem:[%s6 + $0x10] sm:$0xff]
  %v687 = vld [vmem:[%s6 + $0x18] sm:$0xff]
  %v688 = vld [vmem:[%s6 + $0x20] sm:$0xff]
  %v689 = vld [vmem:[%s6 + $0x28] sm:$0xff]
  %v690 = vld [vmem:[%s6 + $0x30] sm:$0xff]
  %v691 = vld [vmem:[%s6 + $0x38] sm:$0xff]
  %v692 = vld [vmem:[%s6 + $0x40] sm:$0xff]
  %v693 = vld [vmem:[%s6 + $0x48] sm:$0xff]
  %v694 = vld [vmem:[%s6 + $0x50] sm:$0xff]
  %v695 = vld [vmem:[%s6 + $0x58] sm:$0xff]
  %v696 = vld [vmem:[%s6 + $0x60] sm:$0xff]
  %v697 = vld [vmem:[%s6 + $0x68] sm:$0xff]
  %v698 = vld [vmem:[%s6 + $0x70] sm:$0xff]
  %v699 = vld [vmem:[%s6 + $0x78] sm:$0xff]
  %v700 = vld [vmem:[%s6 + $0x80] sm:$0xff]
  %v701 = vld [vmem:[%s6 + $0x88] sm:$0xff]
  %v702 = vld [vmem:[%s6 + $0x90] sm:$0xff]
  %v703 = vld [vmem:[%s6 + $0x98] sm:$0xff]
  %v704 = vld [vmem:[%s6 + $0xa0] sm:$0xff]
  %v705 = vld [vmem:[%s6 + $0xa8] sm:$0xff]
  %v706 = vld [vmem:[%s6 + $0xb0] sm:$0xff]
  %v707 = vld [vmem:[%s6 + $0xb8] sm:$0xff]
  %v708 = vld [vmem:[%s6 + $0xc0] sm:$0xff]
  %v709 = vld [vmem:[%s6 + $0xc8] sm:$0xff]
  %v710 = vld [vmem:[%s6 + $0xd0] sm:$0xff]
  %v711 = vld [vmem:[%s6 + $0xd8] sm:$0xff]
  %v712 = vld [vmem:[%s6 + $0xe0] sm:$0xff]
  %v713 = vld [vmem:[%s6 + $0xe8] sm:$0xff]
  %v714 = vld [vmem:[%s6 + $0xf0] sm:$0xff]
  %v715 = vld [vmem:[%s6 + $0xf8] sm:$0xff]
  %v716 = vld [vmem:[%s6 + $0x100] sm:$0xff]
  %v717 = vld [vmem:[%s6 + $0x108] sm:$0xff]
  %v718 = vld [vmem:[%s6 + $0x110] sm:$0xff]
  %v719 = vld [vmem:[%s6 + $0x118] sm:$0xff]
  %v720 = vld [vmem:[%s6 + $0x120] sm:$0xff]
  %v721 = vld [vmem:[%s6 + $0x128] sm:$0xff]
  %v722 = vld [vmem:[%s6 + $0x130] sm:$0xff]
  %v723 = vld [vmem:[%s6 + $0x138] sm:$0xff]
  %v724 = vld [vmem:[%s6 + $0x140] sm:$0xff]
  %v725 = vld [vmem:[%s6 + $0x148] sm:$0xff]
  %v726 = vld [vmem:[%s6 + $0x150] sm:$0xff]
  %v727 = vld [vmem:[%s6 + $0x158] sm:$0xff]
  %v728 = vld [vmem:[%s6 + $0x160] sm:$0xff]
  %v729 = vld [vmem:[%s6 + $0x168] sm:$0xff]
  %v730 = vld [vmem:[%s6 + $0x170] sm:$0xff]
  %v731 = vld [vmem:[%s6 + $0x178] sm:$0xff]
  %v732 = vld [vmem:[%s6 + $0x180] sm:$0xff]
  %v733 = vld [vmem:[%s6 + $0x188] sm:$0xff]
  %v734 = vld [vmem:[%s6 + $0x190] sm:$0xff]
  %v735 = vld [vmem:[%s6 + $0x198] sm:$0xff]
  %v736 = vld [vmem:[%s6 + $0x1a0] sm:$0xff]
  %v737 = vld [vmem:[%s6 + $0x1a8] sm:$0xff]
  %v738 = vld [vmem:[%s6 + $0x1b0] sm:$0xff]
  %v739 = vld [vmem:[%s6 + $0x1b8] sm:$0xff]
  %v740 = vld [vmem:[%s6 + $0x1c0] sm:$0xff]
  %v741 = vld [vmem:[%s6 + $0x1c8] sm:$0xff]
  %v742 = vld [vmem:[%s6 + $0x1d0] sm:$0xff]
  %v743 = vld [vmem:[%s6 + $0x1d8] sm:$0xff]
  %v744 = vld [vmem:[%s6 + $0x1e0] sm:$0xff]
  %v745 = vld [vmem:[%s6 + $0x1e8] sm:$0xff]
  %v746 = vld [vmem:[%s6 + $0x1f0] sm:$0xff]
  %v747 = vld [vmem:[%s6 + $0x1f8] sm:$0xff]
  %748 = vmatprep.subr.mxu0 %v685
  %749 = vmatpush1.msra.mxu0 %v684
  %750 = vmatprep.subr.mxu0 %v689
  %751 = vmatpush1.msra.mxu0 %v688
  %752 = vmatprep.subr.mxu0 %v693
  %753 = vmatpush1.msra.mxu0 %v692
  %754 = vmatprep.subr.mxu0 %v697
  %755 = vmatpush1.msra.mxu0 %v696
  %756 = vmatprep.subr.mxu0 %v701
  %757 = vmatpush1.msra.mxu0 %v700
  %758 = vmatprep.subr.mxu0 %v705
  %759 = vmatpush1.msra.mxu0 %v704
  %760 = vmatprep.subr.mxu0 %v709
  %761 = vmatpush1.msra.mxu0 %v708
  %762 = vmatprep.subr.mxu0 %v713
  %763 = vmatpush1.msra.mxu0 %v712
  %764 = vmatprep.subr.mxu0 %v717
  %765 = vmatpush1.msra.mxu0 %v716
  %766 = vmatprep.subr.mxu0 %v721
  %767 = vmatpush1.msra.mxu0 %v720
  %768 = vmatprep.subr.mxu0 %v725
  %769 = vmatpush1.msra.mxu0 %v724
  %770 = vmatprep.subr.mxu0 %v729
  %771 = vmatpush1.msra.mxu0 %v728
  %772 = vmatprep.subr.mxu0 %v733
  %773 = vmatpush1.msra.mxu0 %v732
  %774 = vmatprep.subr.mxu0 %v737
  %775 = vmatpush1.msra.mxu0 %v736
  %776 = vmatprep.subr.mxu0 %v741
  %777 = vmatpush1.msra.mxu0 %v740
  %778 = vmatprep.subr.mxu0 %v745
  %779 = vmatpush1.msra.mxu0 %v744
  %780 = vmatprep.subr.mxu0 0.0
  %781 = vmatpush1.msra.mxu0 0.0
  %782 = vmatprep.subr.mxu0 0.0
  %783 = vmatpush1.msra.mxu0 0.0
  %784 = vmatprep.subr.mxu0 0.0
  %785 = vmatpush1.msra.mxu0 0.0
  %786 = vmatprep.subr.mxu0 0.0
  %787 = vmatpush1.msra.mxu0 0.0
  %788 = vmatprep.subr.mxu0 0.0
  %789 = vmatpush1.msra.mxu0 0.0
  %790 = vmatprep.subr.mxu0 0.0
  %791 = vmatpush1.msra.mxu0 0.0
  %792 = vmatprep.subr.mxu0 0.0
  %793 = vmatpush1.msra.mxu0 0.0
  %794 = vmatprep.subr.mxu0 0.0
  %795 = vmatpush1.msra.mxu0 0.0
  %796 = vmatprep.subr.mxu0 0.0
  %797 = vmatpush1.msra.mxu0 0.0
  %798 = vmatprep.subr.mxu0 0.0
  %799 = vmatpush1.msra.mxu0 0.0
  %800 = vmatprep.subr.mxu0 0.0
  %801 = vmatpush1.msra.mxu0 0.0
  %802 = vmatprep.subr.mxu0 0.0
  %803 = vmatpush1.msra.mxu0 0.0
  %804 = vmatprep.subr.mxu0 0.0
  %805 = vmatpush1.msra.mxu0 0.0
  %806 = vmatprep.subr.mxu0 0.0
  %807 = vmatpush1.msra.mxu0 0.0
  %808 = vmatprep.subr.mxu0 0.0
  %809 = vmatpush1.msra.mxu0 0.0
  %810 = vmatprep.subr.mxu0 0.0
  %811 = vmatpush1.msra.mxu0 0.0
  %812 = vmatprep.mubr.f32.mxu0 0.0
  %813 = vmatmul.mubr.f32.gmra.mrb[0].mxu0 0.0
  %v814 = vpop.f32.mrb[0].mxu0
  %v815 = vadd.f32 0.0, %v814
  %v816 = vpop.f32.mrb[0].mxu0
  %v817 = vadd.f32 0.0, %v816
  %818 = vdwg.mxu0
  %819 = vmatprep.subr.mxu0 %v687
  %820 = vmatpush1.msra.mxu0 %v686
  %821 = vmatprep.subr.mxu0 %v691
  %822 = vmatpush1.msra.mxu0 %v690
  %823 = vmatprep.subr.mxu0 %v695
  %824 = vmatpush1.msra.mxu0 %v694
  %825 = vmatprep.subr.mxu0 %v699
  %826 = vmatpush1.msra.mxu0 %v698
  %827 = vmatprep.subr.mxu0 %v703
  %828 = vmatpush1.msra.mxu0 %v702
  %829 = vmatprep.subr.mxu0 %v707
  %830 = vmatpush1.msra.mxu0 %v706
  %831 = vmatprep.subr.mxu0 %v711
  %832 = vmatpush1.msra.mxu0 %v710
  %833 = vmatprep.subr.mxu0 %v715
  %834 = vmatpush1.msra.mxu0 %v714
  %835 = vmatprep.subr.mxu0 %v719
  %836 = vmatpush1.msra.mxu0 %v718
  %837 = vmatprep.subr.mxu0 %v723
  %838 = vmatpush1.msra.mxu0 %v722
  %839 = vmatprep.subr.mxu0 %v727
  %840 = vmatpush1.msra.mxu0 %v726
  %841 = vmatprep.subr.mxu0 %v731
  %842 = vmatpush1.msra.mxu0 %v730
  %843 = vmatprep.subr.mxu0 %v735
  %844 = vmatpush1.msra.mxu0 %v734
  %845 = vmatprep.subr.mxu0 %v739
  %846 = vmatpush1.msra.mxu0 %v738
  %847 = vmatprep.subr.mxu0 %v743
  %848 = vmatpush1.msra.mxu0 %v742
  %849 = vmatprep.subr.mxu0 %v747
  %850 = vmatpush1.msra.mxu0 %v746
  %851 = vmatprep.subr.mxu0 0.0
  %852 = vmatpush1.msra.mxu0 0.0
  %853 = vmatprep.subr.mxu0 0.0
  %854 = vmatpush1.msra.mxu0 0.0
  %855 = vmatprep.subr.mxu0 0.0
  %856 = vmatpush1.msra.mxu0 0.0
  %857 = vmatprep.subr.mxu0 0.0
  %858 = vmatpush1.msra.mxu0 0.0
  %859 = vmatprep.subr.mxu0 0.0
  %860 = vmatpush1.msra.mxu0 0.0
  %861 = vmatprep.subr.mxu0 0.0
  %862 = vmatpush1.msra.mxu0 0.0
  %863 = vmatprep.subr.mxu0 0.0
  %864 = vmatpush1.msra.mxu0 0.0
  %865 = vmatprep.subr.mxu0 0.0
  %866 = vmatpush1.msra.mxu0 0.0
  %867 = vmatprep.subr.mxu0 0.0
  %868 = vmatpush1.msra.mxu0 0.0
  %869 = vmatprep.subr.mxu0 0.0
  %870 = vmatpush1.msra.mxu0 0.0
  %871 = vmatprep.subr.mxu0 0.0
  %872 = vmatpush1.msra.mxu0 0.0
  %873 = vmatprep.subr.mxu0 0.0
  %874 = vmatpush1.msra.mxu0 0.0
  %875 = vmatprep.subr.mxu0 0.0
  %876 = vmatpush1.msra.mxu0 0.0
  %877 = vmatprep.subr.mxu0 0.0
  %878 = vmatpush1.msra.mxu0 0.0
  %879 = vmatprep.subr.mxu0 0.0
  %880 = vmatpush1.msra.mxu0 0.0
  %881 = vmatprep.subr.mxu0 0.0
  %882 = vmatpush1.msra.mxu0 0.0
  %883 = vmatprep.mubr.f32.mxu0 0.0
  %884 = vmatmul.mubr.f32.gmra.mrb[0].mxu0 0.0
  %v885 = vpop.f32.mrb[0].mxu0
  %v886 = vadd.f32 0.0, %v885
  %v887 = vpop.f32.mrb[0].mxu0
  %v888 = vadd.f32 0.0, %v887
  %889 = vdwg.mxu0
  %v890 = vadd.f32 %v573, %v815
  %v891 = vadd.f32 %v575, %v817
  %v892 = vadd.f32 %v662, %v886
  %v893 = vadd.f32 %v664, %v888
  %v894 = vxor.u32 %v890, 2147483648
  %v895 = vmul.f32 %v894, 1.442695
  %v896 = vpow.pop %v895
  %v897 = vadd.f32 %v896, 1.0
  %v898 = vrcp.pop %v897
  %v899 = vmul.f32 1.0, %v898
  %v900 = vxor.u32 %v891, 2147483648
  %v901 = vmul.f32 %v900, 1.442695
  %v902 = vpow.pop %v901
  %v903 = vadd.f32 %v902, 1.0
  %v904 = vrcp.pop %v903
  %v905 = vmul.f32 1.0, %v904
  %v906 = vtanh.pop %v892
  %v907 = vxor.u32 %v893, 2147483648
  %v908 = vmul.f32 %v907, 1.442695
  %v909 = vpow.pop %v908
  %v910 = vadd.f32 %v909, 1.0
  %v911 = vrcp.pop %v910
  %v912 = vmul.f32 1.0, %v911
  %v913 = vmul.f32 %v905, 0.0
  %v914 = vmul.f32 %v899, %v906
  %v915 = vadd.f32 %v913, %v914
  %v916 = vtanh.pop %v915
  %v917 = vmul.f32 %v912, %v916
  %918 = vmatprep.subr.mxu0 %v685
  %919 = vmatpush1.msra.mxu0 %v684
  %920 = vmatprep.subr.mxu0 %v689
  %921 = vmatpush1.msra.mxu0 %v688
  %922 = vmatprep.subr.mxu0 %v693
  %923 = vmatpush1.msra.mxu0 %v692
  %924 = vmatprep.subr.mxu0 %v697
  %925 = vmatpush1.msra.mxu0 %v696
  %926 = vmatprep.subr.mxu0 %v701
  %927 = vmatpush1.msra.mxu0 %v700
  %928 = vmatprep.subr.mxu0 %v705
  %929 = vmatpush1.msra.mxu0 %v704
  %930 = vmatprep.subr.mxu0 %v709
  %931 = vmatpush1.msra.mxu0 %v708
  %932 = vmatprep.subr.mxu0 %v713
  %933 = vmatpush1.msra.mxu0 %v712
  %934 = vmatprep.subr.mxu0 %v717
  %935 = vmatpush1.msra.mxu0 %v716
  %936 = vmatprep.subr.mxu0 %v721
  %937 = vmatpush1.msra.mxu0 %v720
  %938 = vmatprep.subr.mxu0 %v725
  %939 = vmatpush1.msra.mxu0 %v724
  %940 = vmatprep.subr.mxu0 %v729
  %941 = vmatpush1.msra.mxu0 %v728
  %942 = vmatprep.subr.mxu0 %v733
  %943 = vmatpush1.msra.mxu0 %v732
  %944 = vmatprep.subr.mxu0 %v737
  %945 = vmatpush1.msra.mxu0 %v736
  %946 = vmatprep.subr.mxu0 %v741
  %947 = vmatpush1.msra.mxu0 %v740
  %948 = vmatprep.subr.mxu0 %v745
  %949 = vmatpush1.msra.mxu0 %v744
  %950 = vmatprep.subr.mxu0 0.0
  %951 = vmatpush1.msra.mxu0 0.0
  %952 = vmatprep.subr.mxu0 0.0
  %953 = vmatpush1.msra.mxu0 0.0
  %954 = vmatprep.subr.mxu0 0.0
  %955 = vmatpush1.msra.mxu0 0.0
  %956 = vmatprep.subr.mxu0 0.0
  %957 = vmatpush1.msra.mxu0 0.0
  %958 = vmatprep.subr.mxu0 0.0
  %959 = vmatpush1.msra.mxu0 0.0
  %960 = vmatprep.subr.mxu0 0.0
  %961 = vmatpush1.msra.mxu0 0.0
  %962 = vmatprep.subr.mxu0 0.0
  %963 = vmatpush1.msra.mxu0 0.0
  %964 = vmatprep.subr.mxu0 0.0
  %965 = vmatpush1.msra.mxu0 0.0
  %966 = vmatprep.subr.mxu0 0.0
  %967 = vmatpush1.msra.mxu0 0.0
  %968 = vmatprep.subr.mxu0 0.0
  %969 = vmatpush1.msra.mxu0 0.0
  %970 = vmatprep.subr.mxu0 0.0
  %971 = vmatpush1.msra.mxu0 0.0
  %972 = vmatprep.subr.mxu0 0.0
  %973 = vmatpush1.msra.mxu0 0.0
  %974 = vmatprep.subr.mxu0 0.0
  %975 = vmatpush1.msra.mxu0 0.0
  %976 = vmatprep.subr.mxu0 0.0
  %977 = vmatpush1.msra.mxu0 0.0
  %978 = vmatprep.subr.mxu0 0.0
  %979 = vmatpush1.msra.mxu0 0.0
  %980 = vmatprep.subr.mxu0 0.0
  %981 = vmatpush1.msra.mxu0 0.0
  %982 = vmatprep.mubr.f32.mxu0 0.0
  %983 = vmatmul.mubr.f32.gmra.mrb[0].mxu0 %v917
  %v984 = vpop.f32.mrb[0].mxu0
  %v985 = vadd.f32 0.0, %v984
  %v986 = vpop.f32.mrb[0].mxu0
  %v987 = vadd.f32 0.0, %v986
  %988 = vdwg.mxu0
  %989 = vmatprep.subr.mxu0 %v687
  %990 = vmatpush1.msra.mxu0 %v686
  %991 = vmatprep.subr.mxu0 %v691
  %992 = vmatpush1.msra.mxu0 %v690
  %993 = vmatprep.subr.mxu0 %v695
  %994 = vmatpush1.msra.mxu0 %v694
  %995 = vmatprep.subr.mxu0 %v699
  %996 = vmatpush1.msra.mxu0 %v698
  %997 = vmatprep.subr.mxu0 %v703
  %998 = vmatpush1.msra.mxu0 %v702
  %999 = vmatprep.subr.mxu0 %v707
  %1000 = vmatpush1.msra.mxu0 %v706
  %1001 = vmatprep.subr.mxu0 %v711
  %1002 = vmatpush1.msra.mxu0 %v710
  %1003 = vmatprep.subr.mxu0 %v715
  %1004 = vmatpush1.msra.mxu0 %v714
  %1005 = vmatprep.subr.mxu0 %v719
  %1006 = vmatpush1.msra.mxu0 %v718
  %1007 = vmatprep.subr.mxu0 %v723
  %1008 = vmatpush1.msra.mxu0 %v722
  %1009 = vmatprep.subr.mxu0 %v727
  %1010 = vmatpush1.msra.mxu0 %v726
  %1011 = vmatprep.subr.mxu0 %v731
  %1012 = vmatpush1.msra.mxu0 %v730
  %1013 = vmatprep.subr.mxu0 %v735
  %1014 = vmatpush1.msra.mxu0 %v734
  %1015 = vmatprep.subr.mxu0 %v739
  %1016 = vmatpush1.msra.mxu0 %v738
  %1017 = vmatprep.subr.mxu0 %v743
  %1018 = vmatpush1.msra.mxu0 %v742
  %1019 = vmatprep.subr.mxu0 %v747
  %1020 = vmatpush1.msra.mxu0 %v746
  %1021 = vmatprep.subr.mxu0 0.0
  %1022 = vmatpush1.msra.mxu0 0.0
  %1023 = vmatprep.subr.mxu0 0.0
  %1024 = vmatpush1.msra.mxu0 0.0
  %1025 = vmatprep.subr.mxu0 0.0
  %1026 = vmatpush1.msra.mxu0 0.0
  %1027 = vmatprep.subr.mxu0 0.0
  %1028 = vmatpush1.msra.mxu0 0.0
  %1029 = vmatprep.subr.mxu0 0.0
  %1030 = vmatpush1.msra.mxu0 0.0
  %1031 = vmatprep.subr.mxu0 0.0
  %1032 = vmatpush1.msra.mxu0 0.0
  %1033 = vmatprep.subr.mxu0 0.0
  %1034 = vmatpush1.msra.mxu0 0.0
  %1035 = vmatprep.subr.mxu0 0.0
  %1036 = vmatpush1.msra.mxu0 0.0
  %1037 = vmatprep.subr.mxu0 0.0
  %1038 = vmatpush1.msra.mxu0 0.0
  %1039 = vmatprep.subr.mxu0 0.0
  %1040 = vmatpush1.msra.mxu0 0.0
  %1041 = vmatprep.subr.mxu0 0.0
  %1042 = vmatpush1.msra.mxu0 0.0
  %1043 = vmatprep.subr.mxu0 0.0
  %1044 = vmatpush1.msra.mxu0 0.0
  %1045 = vmatprep.subr.mxu0 0.0
  %1046 = vmatpush1.msra.mxu0 0.0
  %1047 = vmatprep.subr.mxu0 0.0
  %1048 = vmatpush1.msra.mxu0 0.0
  %1049 = vmatprep.subr.mxu0 0.0
  %1050 = vmatpush1.msra.mxu0 0.0
  %1051 = vmatprep.subr.mxu0 0.0
  %1052 = vmatpush1.msra.mxu0 0.0
  %1053 = vmatprep.mubr.f32.mxu0 0.0
  %1054 = vmatmul.mubr.f32.gmra.mrb[0].mxu0 %v917
  %v1055 = vpop.f32.mrb[0].mxu0
  %v1056 = vadd.f32 0.0, %v1055
  %v1057 = vpop.f32.mrb[0].mxu0
  %v1058 = vadd.f32 0.0, %v1057
  %1059 = vdwg.mxu0
  %v1060 = vadd.f32 %v579, %v985
  %v1061 = vadd.f32 %v581, %v987
  %v1062 = vadd.f32 %v668, %v1056
  %v1063 = vadd.f32 %v670, %v1058
  %v1064 = vxor.u32 %v1060, 2147483648
  %v1065 = vmul.f32 %v1064, 1.442695
  %v1066 = vpow.pop %v1065
  %v1067 = vadd.f32 %v1066, 1.0
  %v1068 = vrcp.pop %v1067
  %v1069 = vmul.f32 1.0, %v1068
  %v1070 = vxor.u32 %v1061, 2147483648
  %v1071 = vmul.f32 %v1070, 1.442695
  %v1072 = vpow.pop %v1071
  %v1073 = vadd.f32 %v1072, 1.0
  %v1074 = vrcp.pop %v1073
  %v1075 = vmul.f32 1.0, %v1074
  %v1076 = vtanh.pop %v1062
  %v1077 = vxor.u32 %v1063, 2147483648
  %v1078 = vmul.f32 %v1077, 1.442695
  %v1079 = vpow.pop %v1078
  %v1080 = vadd.f32 %v1079, 1.0
  %v1081 = vrcp.pop %v1080
  %v1082 = vmul.f32 1.0, %v1081
  %v1083 = vmul.f32 %v1075, %v915
  %v1084 = vmul.f32 %v1069, %v1076
  %v1085 = vadd.f32 %v1083, %v1084
  %v1086 = vtanh.pop %v1085
  %v1087 = vmul.f32 %v1082, %v1086
  %1088 = vmatprep.subr.mxu0 %v685
  %1089 = vmatpush1.msra.mxu0 %v684
  %1090 = vmatprep.subr.mxu0 %v689
  %1091 = vmatpush1.msra.mxu0 %v688
  %1092 = vmatprep.subr.mxu0 %v693
  %1093 = vmatpush1.msra.mxu0 %v692
  %1094 = vmatprep.subr.mxu0 %v697
  %1095 = vmatpush1.msra.mxu0 %v696
  %1096 = vmatprep.subr.mxu0 %v701
  %1097 = vmatpush1.msra.mxu0 %v700
  %1098 = vmatprep.subr.mxu0 %v705
  %1099 = vmatpush1.msra.mxu0 %v704
  %1100 = vmatprep.subr.mxu0 %v709
  %1101 = vmatpush1.msra.mxu0 %v708
  %1102 = vmatprep.subr.mxu0 %v713
  %1103 = vmatpush1.msra.mxu0 %v712
  %1104 = vmatprep.subr.mxu0 %v717
  %1105 = vmatpush1.msra.mxu0 %v716
  %1106 = vmatprep.subr.mxu0 %v721
  %1107 = vmatpush1.msra.mxu0 %v720
  %1108 = vmatprep.subr.mxu0 %v725
  %1109 = vmatpush1.msra.mxu0 %v724
  %1110 = vmatprep.subr.mxu0 %v729
  %1111 = vmatpush1.msra.mxu0 %v728
  %1112 = vmatprep.subr.mxu0 %v733
  %1113 = vmatpush1.msra.mxu0 %v732
  %1114 = vmatprep.subr.mxu0 %v737
  %1115 = vmatpush1.msra.mxu0 %v736
  %1116 = vmatprep.subr.mxu0 %v741
  %1117 = vmatpush1.msra.mxu0 %v740
  %1118 = vmatprep.subr.mxu0 %v745
  %1119 = vmatpush1.msra.mxu0 %v744
  %1120 = vmatprep.subr.mxu0 0.0
  %1121 = vmatpush1.msra.mxu0 0.0
  %1122 = vmatprep.subr.mxu0 0.0
  %1123 = vmatpush1.msra.mxu0 0.0
  %1124 = vmatprep.subr.mxu0 0.0
  %1125 = vmatpush1.msra.mxu0 0.0
  %1126 = vmatprep.subr.mxu0 0.0
  %1127 = vmatpush1.msra.mxu0 0.0
  %1128 = vmatprep.subr.mxu0 0.0
  %1129 = vmatpush1.msra.mxu0 0.0
  %1130 = vmatprep.subr.mxu0 0.0
  %1131 = vmatpush1.msra.mxu0 0.0
  %1132 = vmatprep.subr.mxu0 0.0
  %1133 = vmatpush1.msra.mxu0 0.0
  %1134 = vmatprep.subr.mxu0 0.0
  %1135 = vmatpush1.msra.mxu0 0.0
  %1136 = vmatprep.subr.mxu0 0.0
  %1137 = vmatpush1.msra.mxu0 0.0
  %1138 = vmatprep.subr.mxu0 0.0
  %1139 = vmatpush1.msra.mxu0 0.0
  %1140 = vmatprep.subr.mxu0 0.0
  %1141 = vmatpush1.msra.mxu0 0.0
  %1142 = vmatprep.subr.mxu0 0.0
  %1143 = vmatpush1.msra.mxu0 0.0
  %1144 = vmatprep.subr.mxu0 0.0
  %1145 = vmatpush1.msra.mxu0 0.0
  %1146 = vmatprep.subr.mxu0 0.0
  %1147 = vmatpush1.msra.mxu0 0.0
  %1148 = vmatprep.subr.mxu0 0.0
  %1149 = vmatpush1.msra.mxu0 0.0
  %1150 = vmatprep.subr.mxu0 0.0
  %1151 = vmatpush1.msra.mxu0 0.0
  %1152 = vmatprep.mubr.f32.mxu0 0.0
  %1153 = vmatmul.mubr.f32.gmra.mrb[0].mxu0 %v1087
  %v1154 = vpop.f32.mrb[0].mxu0
  %v1155 = vadd.f32 0.0, %v1154
  %v1156 = vpop.f32.mrb[0].mxu0
  %v1157 = vadd.f32 0.0, %v1156
  %1158 = vdwg.mxu0
  %1159 = vmatprep.subr.mxu0 %v687
  %1160 = vmatpush1.msra.mxu0 %v686
  %1161 = vmatprep.subr.mxu0 %v691
  %1162 = vmatpush1.msra.mxu0 %v690
  %1163 = vmatprep.subr.mxu0 %v695
  %1164 = vmatpush1.msra.mxu0 %v694
  %1165 = vmatprep.subr.mxu0 %v699
  %1166 = vmatpush1.msra.mxu0 %v698
  %1167 = vmatprep.subr.mxu0 %v703
  %1168 = vmatpush1.msra.mxu0 %v702
  %1169 = vmatprep.subr.mxu0 %v707
  %1170 = vmatpush1.msra.mxu0 %v706
  %1171 = vmatprep.subr.mxu0 %v711
  %1172 = vmatpush1.msra.mxu0 %v710
  %1173 = vmatprep.subr.mxu0 %v715
  %1174 = vmatpush1.msra.mxu0 %v714
  %1175 = vmatprep.subr.mxu0 %v719
  %1176 = vmatpush1.msra.mxu0 %v718
  %1177 = vmatprep.subr.mxu0 %v723
  %1178 = vmatpush1.msra.mxu0 %v722
  %1179 = vmatprep.subr.mxu0 %v727
  %1180 = vmatpush1.msra.mxu0 %v726
  %1181 = vmatprep.subr.mxu0 %v731
  %1182 = vmatpush1.msra.mxu0 %v730
  %1183 = vmatprep.subr.mxu0 %v735
  %1184 = vmatpush1.msra.mxu0 %v734
  %1185 = vmatprep.subr.mxu0 %v739
  %1186 = vmatpush1.msra.mxu0 %v738
  %1187 = vmatprep.subr.mxu0 %v743
  %1188 = vmatpush1.msra.mxu0 %v742
  %1189 = vmatprep.subr.mxu0 %v747
  %1190 = vmatpush1.msra.mxu0 %v746
  %1191 = vmatprep.subr.mxu0 0.0
  %1192 = vmatpush1.msra.mxu0 0.0
  %1193 = vmatprep.subr.mxu0 0.0
  %1194 = vmatpush1.msra.mxu0 0.0
  %1195 = vmatprep.subr.mxu0 0.0
  %1196 = vmatpush1.msra.mxu0 0.0
  %1197 = vmatprep.subr.mxu0 0.0
  %1198 = vmatpush1.msra.mxu0 0.0
  %1199 = vmatprep.subr.mxu0 0.0
  %1200 = vmatpush1.msra.mxu0 0.0
  %1201 = vmatprep.subr.mxu0 0.0
  %1202 = vmatpush1.msra.mxu0 0.0
  %1203 = vmatprep.subr.mxu0 0.0
  %1204 = vmatpush1.msra.mxu0 0.0
  %1205 = vmatprep.subr.mxu0 0.0
  %1206 = vmatpush1.msra.mxu0 0.0
  %1207 = vmatprep.subr.mxu0 0.0
  %1208 = vmatpush1.msra.mxu0 0.0
  %1209 = vmatprep.subr.mxu0 0.0
  %1210 = vmatpush1.msra.mxu0 0.0
  %1211 = vmatprep.subr.mxu0 0.0
  %1212 = vmatpush1.msra.mxu0 0.0
  %1213 = vmatprep.subr.mxu0 0.0
  %1214 = vmatpush1.msra.mxu0 0.0
  %1215 = vmatprep.subr.mxu0 0.0
  %1216 = vmatpush1.msra.mxu0 0.0
  %1217 = vmatprep.subr.mxu0 0.0
  %1218 = vmatpush1.msra.mxu0 0.0
  %1219 = vmatprep.subr.mxu0 0.0
  %1220 = vmatpush1.msra.mxu0 0.0
  %1221 = vmatprep.subr.mxu0 0.0
  %1222 = vmatpush1.msra.mxu0 0.0
  %1223 = vmatprep.mubr.f32.mxu0 0.0
  %1224 = vmatmul.mubr.f32.gmra.mrb[0].mxu0 %v1087
  %v1225 = vpop.f32.mrb[0].mxu0
  %v1226 = vadd.f32 0.0, %v1225
  %v1227 = vpop.f32.mrb[0].mxu0
  %v1228 = vadd.f32 0.0, %v1227
  %1229 = vdwg.mxu0
  %v1230 = vadd.f32 %v585, %v1155
  %v1231 = vadd.f32 %v587, %v1157
  %v1232 = vadd.f32 %v674, %v1226
  %v1233 = vadd.f32 %v676, %v1228
  %v1234 = vxor.u32 %v1230, 2147483648
  %v1235 = vmul.f32 %v1234, 1.442695
  %v1236 = vpow.pop %v1235
  %v1237 = vadd.f32 %v1236, 1.0
  %v1238 = vrcp.pop %v1237
  %v1239 = vmul.f32 1.0, %v1238
  %v1240 = vxor.u32 %v1231, 2147483648
  %v1241 = vmul.f32 %v1240, 1.442695
  %v1242 = vpow.pop %v1241
  %v1243 = vadd.f32 %v1242, 1.0
  %v1244 = vrcp.pop %v1243
  %v1245 = vmul.f32 1.0, %v1244
  %v1246 = vtanh.pop %v1232
  %v1247 = vxor.u32 %v1233, 2147483648
  %v1248 = vmul.f32 %v1247, 1.442695
  %v1249 = vpow.pop %v1248
  %v1250 = vadd.f32 %v1249, 1.0
  %v1251 = vrcp.pop %v1250
  %v1252 = vmul.f32 1.0, %v1251
  %v1253 = vmul.f32 %v1245, %v1085
  %v1254 = vmul.f32 %v1239, %v1246
  %v1255 = vadd.f32 %v1253, %v1254
  %v1256 = vtanh.pop %v1255
  %v1257 = vmul.f32 %v1252, %v1256
  %1258 = vmatprep.subr.mxu0 %v685
  %1259 = vmatpush1.msra.mxu0 %v684
  %1260 = vmatprep.subr.mxu0 %v689
  %1261 = vmatpush1.msra.mxu0 %v688
  %1262 = vmatprep.subr.mxu0 %v693
  %1263 = vmatpush1.msra.mxu0 %v692
  %1264 = vmatprep.subr.mxu0 %v697
  %1265 = vmatpush1.msra.mxu0 %v696
  %1266 = vmatprep.subr.mxu0 %v701
  %1267 = vmatpush1.msra.mxu0 %v700
  %1268 = vmatprep.subr.mxu0 %v705
  %1269 = vmatpush1.msra.mxu0 %v704
  %1270 = vmatprep.subr.mxu0 %v709
  %1271 = vmatpush1.msra.mxu0 %v708
  %1272 = vmatprep.subr.mxu0 %v713
  %1273 = vmatpush1.msra.mxu0 %v712
  %1274 = vmatprep.subr.mxu0 %v717
  %1275 = vmatpush1.msra.mxu0 %v716
  %1276 = vmatprep.subr.mxu0 %v721
  %1277 = vmatpush1.msra.mxu0 %v720
  %1278 = vmatprep.subr.mxu0 %v725
  %1279 = vmatpush1.msra.mxu0 %v724
  %1280 = vmatprep.subr.mxu0 %v729
  %1281 = vmatpush1.msra.mxu0 %v728
  %1282 = vmatprep.subr.mxu0 %v733
  %1283 = vmatpush1.msra.mxu0 %v732
  %1284 = vmatprep.subr.mxu0 %v737
  %1285 = vmatpush1.msra.mxu0 %v736
  %1286 = vmatprep.subr.mxu0 %v741
  %1287 = vmatpush1.msra.mxu0 %v740
  %1288 = vmatprep.subr.mxu0 %v745
  %1289 = vmatpush1.msra.mxu0 %v744
  %1290 = vmatprep.subr.mxu0 0.0
  %1291 = vmatpush1.msra.mxu0 0.0
  %1292 = vmatprep.subr.mxu0 0.0
  %1293 = vmatpush1.msra.mxu0 0.0
  %1294 = vmatprep.subr.mxu0 0.0
  %1295 = vmatpush1.msra.mxu0 0.0
  %1296 = vmatprep.subr.mxu0 0.0
  %1297 = vmatpush1.msra.mxu0 0.0
  %1298 = vmatprep.subr.mxu0 0.0
  %1299 = vmatpush1.msra.mxu0 0.0
  %1300 = vmatprep.subr.mxu0 0.0
  %1301 = vmatpush1.msra.mxu0 0.0
  %1302 = vmatprep.subr.mxu0 0.0
  %1303 = vmatpush1.msra.mxu0 0.0
  %1304 = vmatprep.subr.mxu0 0.0
  %1305 = vmatpush1.msra.mxu0 0.0
  %1306 = vmatprep.subr.mxu0 0.0
  %1307 = vmatpush1.msra.mxu0 0.0
  %1308 = vmatprep.subr.mxu0 0.0
  %1309 = vmatpush1.msra.mxu0 0.0
  %1310 = vmatprep.subr.mxu0 0.0
  %1311 = vmatpush1.msra.mxu0 0.0
  %1312 = vmatprep.subr.mxu0 0.0
  %1313 = vmatpush1.msra.mxu0 0.0
  %1314 = vmatprep.subr.mxu0 0.0
  %1315 = vmatpush1.msra.mxu0 0.0
  %1316 = vmatprep.subr.mxu0 0.0
  %1317 = vmatpush1.msra.mxu0 0.0
  %1318 = vmatprep.subr.mxu0 0.0
  %1319 = vmatpush1.msra.mxu0 0.0
  %1320 = vmatprep.subr.mxu0 0.0
  %1321 = vmatpush1.msra.mxu0 0.0
  %1322 = vmatprep.mubr.f32.mxu0 0.0
  %1323 = vmatmul.mubr.f32.gmra.mrb[0].mxu0 %v1257
  %v1324 = vpop.f32.mrb[0].mxu0
  %v1325 = vadd.f32 0.0, %v1324
  %v1326 = vpop.f32.mrb[0].mxu0
  %v1327 = vadd.f32 0.0, %v1326
  %1328 = vdwg.mxu0
  %1329 = vmatprep.subr.mxu0 %v687
  %1330 = vmatpush1.msra.mxu0 %v686
  %1331 = vmatprep.subr.mxu0 %v691
  %1332 = vmatpush1.msra.mxu0 %v690
  %1333 = vmatprep.subr.mxu0 %v695
  %1334 = vmatpush1.msra.mxu0 %v694
  %1335 = vmatprep.subr.mxu0 %v699
  %1336 = vmatpush1.msra.mxu0 %v698
  %1337 = vmatprep.subr.mxu0 %v703
  %1338 = vmatpush1.msra.mxu0 %v702
  %1339 = vmatprep.subr.mxu0 %v707
  %1340 = vmatpush1.msra.mxu0 %v706
  %1341 = vmatprep.subr.mxu0 %v711
  %1342 = vmatpush1.msra.mxu0 %v710
  %1343 = vmatprep.subr.mxu0 %v715
  %1344 = vmatpush1.msra.mxu0 %v714
  %1345 = vmatprep.subr.mxu0 %v719
  %1346 = vmatpush1.msra.mxu0 %v718
  %1347 = vmatprep.subr.mxu0 %v723
  %1348 = vmatpush1.msra.mxu0 %v722
  %1349 = vmatprep.subr.mxu0 %v727
  %1350 = vmatpush1.msra.mxu0 %v726
  %1351 = vmatprep.subr.mxu0 %v731
  %1352 = vmatpush1.msra.mxu0 %v730
  %1353 = vmatprep.subr.mxu0 %v735
  %1354 = vmatpush1.msra.mxu0 %v734
  %1355 = vmatprep.subr.mxu0 %v739
  %1356 = vmatpush1.msra.mxu0 %v738
  %1357 = vmatprep.subr.mxu0 %v743
  %1358 = vmatpush1.msra.mxu0 %v742
  %1359 = vmatprep.subr.mxu0 %v747
  %1360 = vmatpush1.msra.mxu0 %v746
  %1361 = vmatprep.subr.mxu0 0.0
  %1362 = vmatpush1.msra.mxu0 0.0
  %1363 = vmatprep.subr.mxu0 0.0
  %1364 = vmatpush1.msra.mxu0 0.0
  %1365 = vmatprep.subr.mxu0 0.0
  %1366 = vmatpush1.msra.mxu0 0.0
  %1367 = vmatprep.subr.mxu0 0.0
  %1368 = vmatpush1.msra.mxu0 0.0
  %1369 = vmatprep.subr.mxu0 0.0
  %1370 = vmatpush1.msra.mxu0 0.0
  %1371 = vmatprep.subr.mxu0 0.0
  %1372 = vmatpush1.msra.mxu0 0.0
  %1373 = vmatprep.subr.mxu0 0.0
  %1374 = vmatpush1.msra.mxu0 0.0
  %1375 = vmatprep.subr.mxu0 0.0
  %1376 = vmatpush1.msra.mxu0 0.0
  %1377 = vmatprep.subr.mxu0 0.0
  %1378 = vmatpush1.msra.mxu0 0.0
  %1379 = vmatprep.subr.mxu0 0.0
  %1380 = vmatpush1.msra.mxu0 0.0
  %1381 = vmatprep.subr.mxu0 0.0
  %1382 = vmatpush1.msra.mxu0 0.0
  %1383 = vmatprep.subr.mxu0 0.0
  %1384 = vmatpush1.msra.mxu0 0.0
  %1385 = vmatprep.subr.mxu0 0.0
  %1386 = vmatpush1.msra.mxu0 0.0
  %1387 = vmatprep.subr.mxu0 0.0
  %1388 = vmatpush1.msra.mxu0 0.0
  %1389 = vmatprep.subr.mxu0 0.0
  %1390 = vmatpush1.msra.mxu0 0.0
  %1391 = vmatprep.subr.mxu0 0.0
  %1392 = vmatpush1.msra.mxu0 0.0
  %1393 = vmatprep.mubr.f32.mxu0 0.0
  %1394 = vmatmul.mubr.f32.gmra.mrb[0].mxu0 %v1257
  %v1395 = vpop.f32.mrb[0].mxu0
  %v1396 = vadd.f32 0.0, %v1395
  %v1397 = vpop.f32.mrb[0].mxu0
  %v1398 = vadd.f32 0.0, %v1397
  %1399 = vdwg.mxu0
  %v1400 = vadd.f32 %v591, %v1325
  %v1401 = vadd.f32 %v593, %v1327
  %v1402 = vadd.f32 %v680, %v1396
  %v1403 = vadd.f32 %v682, %v1398
  %v1404 = vxor.u32 %v1400, 2147483648
  %v1405 = vmul.f32 %v1404, 1.442695
  %v1406 = vpow.pop %v1405
  %v1407 = vadd.f32 %v1406, 1.0
  %v1408 = vrcp.pop %v1407
  %v1409 = vmul.f32 1.0, %v1408
  %v1410 = vxor.u32 %v1401, 2147483648
  %v1411 = vmul.f32 %v1410, 1.442695
  %v1412 = vpow.pop %v1411
  %v1413 = vadd.f32 %v1412, 1.0
  %v1414 = vrcp.pop %v1413
  %v1415 = vmul.f32 1.0, %v1414
  %v1416 = vtanh.pop %v1402
  %v1417 = vxor.u32 %v1403, 2147483648
  %v1418 = vmul.f32 %v1417, 1.442695
  %v1419 = vpow.pop %v1418
  %v1420 = vadd.f32 %v1419, 1.0
  %v1421 = vrcp.pop %v1420
  %v1422 = vmul.f32 1.0, %v1421
  %v1423 = vmul.f32 %v1415, %v1255
  %v1424 = vmul.f32 %v1409, %v1416
  %v1425 = vadd.f32 %v1423, %v1424
  %v1426 = vtanh.pop %v1425
  %v1427 = vmul.f32 %v1422, %v1426
  %v1428 = vld [vmem:[%s8] sm:$0xff]
  %v1429 = vld [vmem:[%s8 + $0x8] sm:$0xff]
  %v1430 = vld [vmem:[%s8 + $0x10] sm:$0xff]
  %v1431 = vld [vmem:[%s8 + $0x18] sm:$0xff]
  %v1432 = vld [vmem:[%s8 + $0x20] sm:$0xff]
  %v1433 = vld [vmem:[%s8 + $0x28] sm:$0xff]
  %v1434 = vld [vmem:[%s8 + $0x30] sm:$0xff]
  %v1435 = vld [vmem:[%s8 + $0x38] sm:$0xff]
  %v1436 = vld [vmem:[%s8 + $0x40] sm:$0xff]
  %v1437 = vld [vmem:[%s8 + $0x48] sm:$0xff]
  %v1438 = vld [vmem:[%s8 + $0x50] sm:$0xff]
  %v1439 = vld [vmem:[%s8 + $0x58] sm:$0xff]
  %v1440 = vld [vmem:[%s8 + $0x60] sm:$0xff]
  %v1441 = vld [vmem:[%s8 + $0x68] sm:$0xff]
  %v1442 = vld [vmem:[%s8 + $0x70] sm:$0xff]
  %v1443 = vld [vmem:[%s8 + $0x78] sm:$0xff]
  %v1444 = vld [vmem:[%s9] sm:$0x1]
  %v1446 = vlaneseq
  %v1447 = vshrl.u32 %v1446, 7
  %v1448 = vsub.s32 0, %v1447
  %v1449 = vrot.slane %v1444, %v1448
  %1451 = vmatprep.subr.mxu0 0.0
  %1452 = vmatpush1.msra.mxu0 %v1428
  %1453 = vmatprep.subr.mxu0 0.0
  %1454 = vmatpush1.msra.mxu0 %v1429
  %1455 = vmatprep.subr.mxu0 0.0
  %1456 = vmatpush1.msra.mxu0 %v1430
  %1457 = vmatprep.subr.mxu0 0.0
  %1458 = vmatpush1.msra.mxu0 %v1431
  %1459 = vmatprep.subr.mxu0 0.0
  %1460 = vmatpush1.msra.mxu0 %v1432
  %1461 = vmatprep.subr.mxu0 0.0
  %1462 = vmatpush1.msra.mxu0 %v1433
  %1463 = vmatprep.subr.mxu0 0.0
  %1464 = vmatpush1.msra.mxu0 %v1434
  %1465 = vmatprep.subr.mxu0 0.0
  %1466 = vmatpush1.msra.mxu0 %v1435
  %1467 = vmatprep.subr.mxu0 0.0
  %1468 = vmatpush1.msra.mxu0 %v1436
  %1469 = vmatprep.subr.mxu0 0.0
  %1470 = vmatpush1.msra.mxu0 %v1437
  %1471 = vmatprep.subr.mxu0 0.0
  %1472 = vmatpush1.msra.mxu0 %v1438
  %1473 = vmatprep.subr.mxu0 0.0
  %1474 = vmatpush1.msra.mxu0 %v1439
  %1475 = vmatprep.subr.mxu0 0.0
  %1476 = vmatpush1.msra.mxu0 %v1440
  %1477 = vmatprep.subr.mxu0 0.0
  %1478 = vmatpush1.msra.mxu0 %v1441
  %1479 = vmatprep.subr.mxu0 0.0
  %1480 = vmatpush1.msra.mxu0 %v1442
  %1481 = vmatprep.subr.mxu0 0.0
  %1482 = vmatpush1.msra.mxu0 %v1443
  %1483 = vmatprep.subr.mxu0 0.0
  %1484 = vmatpush1.msra.mxu0 0.0
  %1485 = vmatprep.subr.mxu0 0.0
  %1486 = vmatpush1.msra.mxu0 0.0
  %1487 = vmatprep.subr.mxu0 0.0
  %1488 = vmatpush1.msra.mxu0 0.0
  %1489 = vmatprep.subr.mxu0 0.0
  %1490 = vmatpush1.msra.mxu0 0.0
  %1491 = vmatprep.subr.mxu0 0.0
  %1492 = vmatpush1.msra.mxu0 0.0
  %1493 = vmatprep.subr.mxu0 0.0
  %1494 = vmatpush1.msra.mxu0 0.0
  %1495 = vmatprep.subr.mxu0 0.0
  %1496 = vmatpush1.msra.mxu0 0.0
  %1497 = vmatprep.subr.mxu0 0.0
  %1498 = vmatpush1.msra.mxu0 0.0
  %1499 = vmatprep.subr.mxu0 0.0
  %1500 = vmatpush1.msra.mxu0 0.0
  %1501 = vmatprep.subr.mxu0 0.0
  %1502 = vmatpush1.msra.mxu0 0.0
  %1503 = vmatprep.subr.mxu0 0.0
  %1504 = vmatpush1.msra.mxu0 0.0
  %1505 = vmatprep.subr.mxu0 0.0
  %1506 = vmatpush1.msra.mxu0 0.0
  %1507 = vmatprep.subr.mxu0 0.0
  %1508 = vmatpush1.msra.mxu0 0.0
  %1509 = vmatprep.subr.mxu0 0.0
  %1510 = vmatpush1.msra.mxu0 0.0
  %1511 = vmatprep.subr.mxu0 0.0
  %1512 = vmatpush1.msra.mxu0 0.0
  %1513 = vmatprep.subr.mxu0 0.0
  %1514 = vmatpush1.msra.mxu0 0.0
  %1515 = vmatprep.mubr.f32.mxu0 0.0
  %1516 = vmatmul.mubr.f32.gmra.mrb[0].mxu0 %v1427
  %v1517 = vpop.f32.mrb[0].mxu0
  %v1518 = vadd.f32 %v1449, %v1517
  %v1519 = vpop.f32.mrb[0].mxu0
  %1520 = vdwg.mxu0
  %1521 = vst [vmem:[%s10] sm:$0xff] %v1518
  // Predicated region
  $region42: #{cnn_lstm_forward.1} parent=0 // pred_check
    _
  $region43: #{cnn_lstm_forward.1} parent=0 // pred_check_branch
    %1523 = sbr.rel (0) target = $region45
  $region44: #{cnn_lstm_forward.1} parent=0 // pred_region
    _
  $region45: #{cnn_lstm_forward.1} parent=0 // pred_fallthru
    _
  // Predicated region
  $region46: #{cnn_lstm_forward.1} parent=0 // pred_check
    _
  $region47: #{cnn_lstm_forward.1} parent=0 // pred_check_branch
    %1525 = sbr.rel (0) target = $region49
  $region48: #{cnn_lstm_forward.1} parent=0 // pred_region
    _
  $region49: #{cnn_lstm_forward.1} parent=0 // pred_fallthru
    _

</llo_original>
